<compile_context>
chip_gen: v6e
topology: v6e:2x2x1
jax: 0.10.0
libtpu: 0.0.40
codegen_flags: <defaults>
</compile_context>

<pallas_src>
import functools
import math

import jax
import jax.numpy as jnp
from jax.experimental import pallas as pl
from jax.experimental.pallas import tpu as pltpu


def encoder_layers_kernel(x0_ref,
                          wq_ref, bq_ref, wk_ref, bk_ref, wv_ref, bv_ref,
                          wo_ref, bo_ref, g1_ref, beta1_ref,
                          w1_ref, b1_ref, w2_ref, b2_ref, g2_ref, beta2_ref,
                          o_ref, ctx_scr,
                          *, n_head, seq, nb_per_block, eps):
    """Grid = (row_block, layer).  o_ref is the resident activation slab."""
    li = pl.program_id(1)

    # Layer 0: load the embedded inputs for this row block into the output
    # ref, which doubles as the activation buffer across all layers.
    @pl.when(li == 0)
    def _init():
        o_ref[...] = x0_ref[...]

    D = o_ref.shape[-1]
    dh = D // n_head

    def layer_norm(u, g_r, b_r):
        mu = jnp.mean(u, axis=-1, keepdims=True)
        var = jnp.mean((u - mu) ** 2, axis=-1, keepdims=True)
        return (u - mu) * jax.lax.rsqrt(var + eps) * g_r[...] + b_r[...]

    def matmul(a_bf16, w_r, b_r):
        return jnp.dot(a_bf16, w_r[...],
                       preferred_element_type=jnp.float32) + b_r[...]

    def per_batch(lb, carry):
        r0 = pl.multiple_of(lb * seq, seq)
        rows = pl.ds(r0, seq)
        x = o_ref[rows, :]                                   # (S, D) f32
        xb = x.astype(jnp.bfloat16)

        # 1/sqrt(dh) is already folded into wq / bq wrapper-side.
        q = matmul(xb, wq_ref, bq_ref)
        k = matmul(xb, wk_ref, bk_ref)
        v = matmul(xb, wv_ref, bv_ref)

        for h in range(n_head):                              # short, unrolled
            c0 = h * dh
            qh = q[:, c0:c0 + dh].astype(jnp.bfloat16)
            kh = k[:, c0:c0 + dh].astype(jnp.bfloat16)
            vh = v[:, c0:c0 + dh].astype(jnp.bfloat16)
            s = jax.lax.dot_general(qh, kh, (((1,), (1,)), ((), ())),
                                    preferred_element_type=jnp.float32)
            m = jnp.max(s, axis=-1, keepdims=True)
            p = jnp.exp(s - m)
            p = p * pl.reciprocal(jnp.sum(p, axis=-1, keepdims=True),
                                  approx=True)
            ctx = jnp.dot(p.astype(jnp.bfloat16), vh,
                          preferred_element_type=jnp.float32)
            ctx_scr[:, c0:c0 + dh] = ctx                     # (S, dh) f32

        # Single full-K output projection: concat_h(ctx_h) @ Wo + bo.
        attn = matmul(ctx_scr[...].astype(jnp.bfloat16), wo_ref, bo_ref)
        x1 = layer_norm(x + attn, g1_ref, beta1_ref)

        # Position-wise FFN on this (S, D) row block only.
        h1 = jnp.maximum(matmul(x1.astype(jnp.bfloat16), w1_ref, b1_ref), 0.0)
        ffn = matmul(h1.astype(jnp.bfloat16), w2_ref, b2_ref)
        x2 = layer_norm(x1 + ffn, g2_ref, beta2_ref)

        o_ref[rows, :] = x2
        return carry

    jax.lax.fori_loop(0, nb_per_block, per_batch, 0)


def sinusoidal_pos_encoding(max_len, d_model):
    pos = jnp.arange(max_len, dtype=jnp.float32)[:, None]            # (L, 1)
    i = jnp.arange(0, d_model, 2, dtype=jnp.float32)[None, :]        # (1, D/2)
    angle = pos / jnp.power(10000.0, i / d_model)                    # (L, D/2)
    pe = jnp.zeros((max_len, d_model), jnp.float32)
    pe = pe.at[:, 0::2].set(jnp.sin(angle))
    pe = pe.at[:, 1::2].set(jnp.cos(angle))
    return pe


def init_encoder_params(key, enc_voc_size, max_len, d_model, ffn_hidden, n_layers):
    keys = jax.random.split(key, 1 + n_layers)
    tok_emb = jax.random.normal(keys[0], (enc_voc_size, d_model), jnp.float32) * 0.02
    pos_emb = sinusoidal_pos_encoding(max_len, d_model)

    layers = []
    for li in range(n_layers):
        lk = jax.random.split(keys[1 + li], 12)
        s = 0.02
        layers.append({
            "wq": jax.random.normal(lk[0], (d_model, d_model), jnp.float32) * s,
            "bq": jax.random.normal(lk[6], (1, d_model), jnp.float32) * s,
            "wk": jax.random.normal(lk[1], (d_model, d_model), jnp.float32) * s,
            "bk": jax.random.normal(lk[7], (1, d_model), jnp.float32) * s,
            "wv": jax.random.normal(lk[2], (d_model, d_model), jnp.float32) * s,
            "bv": jax.random.normal(lk[8], (1, d_model), jnp.float32) * s,
            "wo": jax.random.normal(lk[3], (d_model, d_model), jnp.float32) * s,
            "bo": jax.random.normal(lk[9], (1, d_model), jnp.float32) * s,
            "g1": jnp.ones((1, d_model), jnp.float32),
            "beta1": jnp.zeros((1, d_model), jnp.float32),
            "w_f1": jax.random.normal(lk[4], (d_model, ffn_hidden), jnp.float32) * s,
            "b_f1": jax.random.normal(lk[10], (1, ffn_hidden), jnp.float32) * s,
            "w_f2": jax.random.normal(lk[5], (ffn_hidden, d_model), jnp.float32) * s,
            "b_f2": jax.random.normal(lk[11], (1, d_model), jnp.float32) * s,
            "g2": jnp.ones((1, d_model), jnp.float32),
            "beta2": jnp.zeros((1, d_model), jnp.float32),
        })
    return {"tok_emb": tok_emb, "pos_emb": pos_emb, "layers": layers}


def encoder_forward(params, x_tokens, src_mask, n_head):
    """x_tokens: (B, S) int32 token ids -> (B, S, D) f32.

    src_mask is accepted but unused (the reference forward calls layer(x)
    without passing the mask)."""
    del src_mask
    B, S = x_tokens.shape
    tok_emb = params["tok_emb"]
    V, D = tok_emb.shape
    layers = params["layers"]
    L = len(layers)
    F = layers[0]["w_f1"].shape[1]
    dh = D // n_head
    BS = B * S

    # --- embedding wrapper-side (cheap XLA gather; no vocab table in VMEM) ----
    pos = params["pos_emb"][:S]                                     # (S, D)
    x0 = (jnp.take(tok_emb, x_tokens, axis=0) + pos[None, :, :])    # (B, S, D)
    x0 = x0.reshape(BS, D).astype(jnp.float32)
    # dropout(drop_prob) -> identity (eval mode)

    # --- row-block sizing: whole batches per block, ~512 rows target ----------
    target_rows = 512
    block_b = max(1, min(B, max(1, target_rows // S)))
    while B % block_b:
        block_b -= 1
    nb = B // block_b
    block_rows = block_b * S

    # --- weight packing: stacked leading [L] axis, bf16 matmul weights --------
    scale = 1.0 / math.sqrt(dh)

    def stack(name, dtype=jnp.float32):
        return jnp.stack([lp[name] for lp in layers]).astype(dtype)

    wq = (stack("wq") * scale).astype(jnp.bfloat16)   # fold 1/sqrt(dh) into Wq
    bq = stack("bq") * scale                          # ... and bq
    wk = stack("wk", jnp.bfloat16)
    wv = stack("wv", jnp.bfloat16)
    wo = stack("wo", jnp.bfloat16)
    w1 = stack("w_f1", jnp.bfloat16)
    w2 = stack("w_f2", jnp.bfloat16)
    bk, bv, bo = stack("bk"), stack("bv"), stack("bo")
    b1, b2 = stack("b_f1"), stack("b_f2")
    g1, beta1 = stack("g1"), stack("beta1")
    g2, beta2 = stack("g2"), stack("beta2")

    operands = (x0, wq, bq, wk, bk, wv, bv, wo, bo, g1, beta1,
                w1, b1, w2, b2, g2, beta2)

    def layer_spec(shape):                   # leading [L] axis squeezed away
        nd = len(shape) - 1
        return pl.BlockSpec((None,) + tuple(shape[1:]),
                            lambda b, l, _nd=nd: (l,) + (0,) * _nd)

    x0_spec = pl.BlockSpec((block_rows, D), lambda b, l: (b, 0))
    in_specs = [x0_spec] + [layer_spec(w.shape) for w in operands[1:]]
    out_spec = pl.BlockSpec((block_rows, D), lambda b, l: (b, 0))

    flops = L * B * (8 * S * D * D + 4 * S * S * D + 4 * S * D * F)
    transcendentals = L * B * (n_head * S * S + n_head * S + 2 * S)
    weight_bytes = sum(int(a.size) * a.dtype.itemsize for a in operands[1:])
    bytes_accessed = int(nb * weight_bytes + 2 * BS * D * 4)

    out_flat = pl.pallas_call(
        functools.partial(encoder_layers_kernel, n_head=n_head, seq=S,
                          nb_per_block=block_b, eps=1e-12),
        out_shape=jax.ShapeDtypeStruct((BS, D), jnp.float32),
        grid_spec=pltpu.PrefetchScalarGridSpec(
            num_scalar_prefetch=0,
            grid=(nb, L),                    # (row blocks) x (encoder layers)
            in_specs=in_specs,
            out_specs=out_spec,
            scratch_shapes=[pltpu.VMEM((S, D), jnp.float32)],   # per-batch ctx
        ),
        compiler_params=pltpu.CompilerParams(
            dimension_semantics=("parallel", "arbitrary"),
            vmem_limit_bytes=32 * 1024 * 1024),
        cost_estimate=pl.CostEstimate(flops=flops,
                                      transcendentals=transcendentals,
                                      bytes_accessed=bytes_accessed),
    )(*operands)

    return out_flat.reshape(B, S, D)


if __name__ == "__main__":
    enc_voc_size = 100
    max_len = 16
    d_model = 32
    ffn_hidden = 64
    n_head = 4
    n_layers = 2
    drop_prob = 0.1  # unused in eval-mode forward

    B, S = 2, 8

    key = jax.random.PRNGKey(0)
    pkey, xkey = jax.random.split(key)
    params = init_encoder_params(pkey, enc_voc_size, max_len, d_model,
                                 ffn_hidden, n_layers)

    x_tokens = jax.random.randint(xkey, (B, S), 0, enc_voc_size, dtype=jnp.int32)
    src_mask = jnp.ones((B, 1, 1, S), jnp.float32)  # accepted, ignored (matches module)

    out = encoder_forward(params, x_tokens, src_mask, n_head)
    jax.block_until_ready(out)
    assert out.shape == (B, S, d_model), out.shape
    assert bool(jnp.all(jnp.isfinite(out)))
    print("KERNEL_OK")
</pallas_src>

<mosaic_0001>
module attributes {stable_mosaic.version = 11 : i64} {
  func.func @encoder_layers_kernel(%arg0: i32, %arg1: i32, %arg2: memref<16x32xf32, #tpu.memory_space<vmem>>, %arg3: memref<1x32x32xbf16, #tpu.memory_space<vmem>>, %arg4: memref<1x1x32xf32, #tpu.memory_space<vmem>>, %arg5: memref<1x32x32xbf16, #tpu.memory_space<vmem>>, %arg6: memref<1x1x32xf32, #tpu.memory_space<vmem>>, %arg7: memref<1x32x32xbf16, #tpu.memory_space<vmem>>, %arg8: memref<1x1x32xf32, #tpu.memory_space<vmem>>, %arg9: memref<1x32x32xbf16, #tpu.memory_space<vmem>>, %arg10: memref<1x1x32xf32, #tpu.memory_space<vmem>>, %arg11: memref<1x1x32xf32, #tpu.memory_space<vmem>>, %arg12: memref<1x1x32xf32, #tpu.memory_space<vmem>>, %arg13: memref<1x32x64xbf16, #tpu.memory_space<vmem>>, %arg14: memref<1x1x64xf32, #tpu.memory_space<vmem>>, %arg15: memref<1x64x32xbf16, #tpu.memory_space<vmem>>, %arg16: memref<1x1x32xf32, #tpu.memory_space<vmem>>, %arg17: memref<1x1x32xf32, #tpu.memory_space<vmem>>, %arg18: memref<1x1x32xf32, #tpu.memory_space<vmem>>, %arg19: memref<16x32xf32, #tpu.memory_space<vmem>>, %arg20: memref<8x32xf32, #tpu.memory_space<vmem>>) attributes {dimension_semantics = [#tpu.dimension_semantics<parallel>, #tpu.dimension_semantics<arbitrary>], iteration_bounds = array<i64: 1, 2>, scalar_prefetch = 0 : i64, scratch_operands = 1 : i64, tpu.core_type = #tpu.core_type<tc>, window_params = [{transform_indices = @transform_0, window_bounds = array<i64: 16, 32>}, {transform_indices = @transform_1, window_bounds = array<i64: 1, 32, 32>}, {transform_indices = @transform_2, window_bounds = array<i64: 1, 1, 32>}, {transform_indices = @transform_3, window_bounds = array<i64: 1, 32, 32>}, {transform_indices = @transform_4, window_bounds = array<i64: 1, 1, 32>}, {transform_indices = @transform_5, window_bounds = array<i64: 1, 32, 32>}, {transform_indices = @transform_6, window_bounds = array<i64: 1, 1, 32>}, {transform_indices = @transform_7, window_bounds = array<i64: 1, 32, 32>}, {transform_indices = @transform_8, window_bounds = array<i64: 1, 1, 32>}, {transform_indices = @transform_9, window_bounds = array<i64: 1, 1, 32>}, {transform_indices = @transform_10, window_bounds = array<i64: 1, 1, 32>}, {transform_indices = @transform_11, window_bounds = array<i64: 1, 32, 64>}, {transform_indices = @transform_12, window_bounds = array<i64: 1, 1, 64>}, {transform_indices = @transform_13, window_bounds = array<i64: 1, 64, 32>}, {transform_indices = @transform_14, window_bounds = array<i64: 1, 1, 32>}, {transform_indices = @transform_15, window_bounds = array<i64: 1, 1, 32>}, {transform_indices = @transform_16, window_bounds = array<i64: 1, 1, 32>}, {transform_indices = @transform_17, window_bounds = array<i64: 16, 32>}]} {
    %c0_i32 = arith.constant 0 : i32
    %0 = arith.cmpi eq, %arg1, %c0_i32 : i32
    %1 = arith.extui %0 : i1 to i32
    %c0_i32_0 = arith.constant 0 : i32
    %2 = arith.cmpi ne, %1, %c0_i32_0 : i32
    scf.if %2 {
      %c0 = arith.constant 0 : index
      %c0_3 = arith.constant 0 : index
      %4 = vector.load %arg2[%c0, %c0_3] : memref<16x32xf32, #tpu.memory_space<vmem>>, vector<16x32xf32>
      %c0_4 = arith.constant 0 : index
      %c0_5 = arith.constant 0 : index
      %5 = vector.load %arg19[%c0_4, %c0_5] : memref<16x32xf32, #tpu.memory_space<vmem>>, vector<16x32xf32>
      tpu.vector_store %arg19[%c0_4, %c0_5], %4 {strides = array<i32>} : memref<16x32xf32, #tpu.memory_space<vmem>>, vector<16x32xf32>,
    } else {
    }
    %c0_i32_1 = arith.constant 0 : i32
    %c2_i32 = arith.constant 2 : i32
    %3 = arith.addi %c0_i32_1, %c2_i32 : i32
    %c1_i32 = arith.constant 1 : i32
    scf.for %arg21 = %c0_i32_1 to %3 step %c1_i32  : i32 {
      %c8_i32 = arith.constant 8 : i32
      %4 = arith.muli %arg21, %c8_i32 : i32
      %5 = tpu.assume_multiple %4, 8 : i32
      %6 = arith.index_cast %5 : i32 to index
      %c0 = arith.constant 0 : index
      %7 = vector.load %arg19[%6, %c0] : memref<16x32xf32, #tpu.memory_space<vmem>>, vector<8x32xf32>
      %8 = arith.truncf %7 : vector<8x32xf32> to vector<8x32xbf16>
      %c0_3 = arith.constant 0 : index
      %c0_4 = arith.constant 0 : index
      %c0_5 = arith.constant 0 : index
      %9 = vector.load %arg3[%c0_3, %c0_4, %c0_5] : memref<1x32x32xbf16, #tpu.memory_space<vmem>>, vector<1x32x32xbf16>
      %10 = vector.shape_cast %9 : vector<1x32x32xbf16> to vector<32x32xbf16>
      %cst = arith.constant dense<0.000000e+00> : vector<8x32xf32>
      %11 = tpu.matmul %8, %10, %cst {dimension_numbers = #tpu.dot_dimension_numbers<[1], [0], [0], [1], [0, 0, 1, 1], [], []>} : vector<8x32xbf16>, vector<32x32xbf16>, vector<8x32xf32> -> vector<8x32xf32>
      %c0_6 = arith.constant 0 : index
      %c0_7 = arith.constant 0 : index
      %c0_8 = arith.constant 0 : index
      %12 = vector.load %arg4[%c0_6, %c0_7, %c0_8] : memref<1x1x32xf32, #tpu.memory_space<vmem>>, vector<1x1x32xf32>
      %13 = vector.shape_cast %12 : vector<1x1x32xf32> to vector<1x32xf32>
      %14 = vector.broadcast %13 : vector<1x32xf32> to vector<8x32xf32>
      %15 = arith.addf %11, %14 : vector<8x32xf32>
      %c0_9 = arith.constant 0 : index
      %c0_10 = arith.constant 0 : index
      %c0_11 = arith.constant 0 : index
      %16 = vector.load %arg5[%c0_9, %c0_10, %c0_11] : memref<1x32x32xbf16, #tpu.memory_space<vmem>>, vector<1x32x32xbf16>
      %17 = vector.shape_cast %16 : vector<1x32x32xbf16> to vector<32x32xbf16>
      %cst_12 = arith.constant dense<0.000000e+00> : vector<8x32xf32>
      %18 = tpu.matmul %8, %17, %cst_12 {dimension_numbers = #tpu.dot_dimension_numbers<[1], [0], [0], [1], [0, 0, 1, 1], [], []>} : vector<8x32xbf16>, vector<32x32xbf16>, vector<8x32xf32> -> vector<8x32xf32>
      %c0_13 = arith.constant 0 : index
      %c0_14 = arith.constant 0 : index
      %c0_15 = arith.constant 0 : index
      %19 = vector.load %arg6[%c0_13, %c0_14, %c0_15] : memref<1x1x32xf32, #tpu.memory_space<vmem>>, vector<1x1x32xf32>
      %20 = vector.shape_cast %19 : vector<1x1x32xf32> to vector<1x32xf32>
      %21 = vector.broadcast %20 : vector<1x32xf32> to vector<8x32xf32>
      %22 = arith.addf %18, %21 : vector<8x32xf32>
      %c0_16 = arith.constant 0 : index
      %c0_17 = arith.constant 0 : index
      %c0_18 = arith.constant 0 : index
      %23 = vector.load %arg7[%c0_16, %c0_17, %c0_18] : memref<1x32x32xbf16, #tpu.memory_space<vmem>>, vector<1x32x32xbf16>
      %24 = vector.shape_cast %23 : vector<1x32x32xbf16> to vector<32x32xbf16>
      %cst_19 = arith.constant dense<0.000000e+00> : vector<8x32xf32>
      %25 = tpu.matmul %8, %24, %cst_19 {dimension_numbers = #tpu.dot_dimension_numbers<[1], [0], [0], [1], [0, 0, 1, 1], [], []>} : vector<8x32xbf16>, vector<32x32xbf16>, vector<8x32xf32> -> vector<8x32xf32>
      %c0_20 = arith.constant 0 : index
      %c0_21 = arith.constant 0 : index
      %c0_22 = arith.constant 0 : index
      %26 = vector.load %arg8[%c0_20, %c0_21, %c0_22] : memref<1x1x32xf32, #tpu.memory_space<vmem>>, vector<1x1x32xf32>
      %27 = vector.shape_cast %26 : vector<1x1x32xf32> to vector<1x32xf32>
      %28 = vector.broadcast %27 : vector<1x32xf32> to vector<8x32xf32>
      %29 = arith.addf %25, %28 : vector<8x32xf32>
      %30 = vector.extract_strided_slice %15 {offsets = [0, 0], sizes = [8, 8], strides = [1, 1]} : vector<8x32xf32> to vector<8x8xf32>
      %31 = arith.truncf %30 : vector<8x8xf32> to vector<8x8xbf16>
      %32 = vector.extract_strided_slice %22 {offsets = [0, 0], sizes = [8, 8], strides = [1, 1]} : vector<8x32xf32> to vector<8x8xf32>
      %33 = arith.truncf %32 : vector<8x8xf32> to vector<8x8xbf16>
      %34 = vector.extract_strided_slice %29 {offsets = [0, 0], sizes = [8, 8], strides = [1, 1]} : vector<8x32xf32> to vector<8x8xf32>
      %35 = arith.truncf %34 : vector<8x8xf32> to vector<8x8xbf16>
      %cst_23 = arith.constant dense<0.000000e+00> : vector<8x8xf32>
      %36 = tpu.matmul %31, %33, %cst_23 {dimension_numbers = #tpu.dot_dimension_numbers<[1], [1], [0], [0], [0, 0, 1, 0], [], []>} : vector<8x8xbf16>, vector<8x8xbf16>, vector<8x8xf32> -> vector<8x8xf32>
      %cst_24 = arith.constant dense<0xFF800000> : vector<8xf32>
      %37 = vector.multi_reduction <maximumf>, %36, %cst_24 [1] : vector<8x8xf32> to vector<8xf32>
      %38 = vector.shape_cast %37 : vector<8xf32> to vector<8x1xf32>
      %39 = vector.broadcast %38 : vector<8x1xf32> to vector<8x8xf32>
      %40 = arith.subf %36, %39 : vector<8x8xf32>
      %41 = math.exp %40 : vector<8x8xf32>
      %cst_25 = arith.constant dense<0.000000e+00> : vector<8xf32>
      %42 = vector.multi_reduction <add>, %41, %cst_25 [1] : vector<8x8xf32> to vector<8xf32>
      %43 = vector.shape_cast %42 : vector<8xf32> to vector<8x1xf32>
      %44 = tpu.reciprocal %43 {approx = true} : vector<8x1xf32> -> vector<8x1xf32>
      %45 = vector.broadcast %44 : vector<8x1xf32> to vector<8x8xf32>
      %46 = arith.mulf %41, %45 : vector<8x8xf32>
      %47 = arith.truncf %46 : vector<8x8xf32> to vector<8x8xbf16>
      %cst_26 = arith.constant dense<0.000000e+00> : vector<8x8xf32>
      %48 = tpu.matmul %47, %35, %cst_26 {dimension_numbers = #tpu.dot_dimension_numbers<[1], [0], [0], [1], [0, 0, 1, 1], [], []>} : vector<8x8xbf16>, vector<8x8xbf16>, vector<8x8xf32> -> vector<8x8xf32>
      %c0_27 = arith.constant 0 : index
      %c0_28 = arith.constant 0 : index
      %49 = vector.load %arg20[%c0_27, %c0_28] : memref<8x32xf32, #tpu.memory_space<vmem>>, vector<8x8xf32>
      tpu.vector_store %arg20[%c0_27, %c0_28], %48 {strides = array<i32>} : memref<8x32xf32, #tpu.memory_space<vmem>>, vector<8x8xf32>,
      %50 = vector.extract_strided_slice %15 {offsets = [0, 8], sizes = [8, 8], strides = [1, 1]} : vector<8x32xf32> to vector<8x8xf32>
      %51 = arith.truncf %50 : vector<8x8xf32> to vector<8x8xbf16>
      %52 = vector.extract_strided_slice %22 {offsets = [0, 8], sizes = [8, 8], strides = [1, 1]} : vector<8x32xf32> to vector<8x8xf32>
      %53 = arith.truncf %52 : vector<8x8xf32> to vector<8x8xbf16>
      %54 = vector.extract_strided_slice %29 {offsets = [0, 8], sizes = [8, 8], strides = [1, 1]} : vector<8x32xf32> to vector<8x8xf32>
      %55 = arith.truncf %54 : vector<8x8xf32> to vector<8x8xbf16>
      %cst_29 = arith.constant dense<0.000000e+00> : vector<8x8xf32>
      %56 = tpu.matmul %51, %53, %cst_29 {dimension_numbers = #tpu.dot_dimension_numbers<[1], [1], [0], [0], [0, 0, 1, 0], [], []>} : vector<8x8xbf16>, vector<8x8xbf16>, vector<8x8xf32> -> vector<8x8xf32>
      %cst_30 = arith.constant dense<0xFF800000> : vector<8xf32>
      %57 = vector.multi_reduction <maximumf>, %56, %cst_30 [1] : vector<8x8xf32> to vector<8xf32>
      %58 = vector.shape_cast %57 : vector<8xf32> to vector<8x1xf32>
      %59 = vector.broadcast %58 : vector<8x1xf32> to vector<8x8xf32>
      %60 = arith.subf %56, %59 : vector<8x8xf32>
      %61 = math.exp %60 : vector<8x8xf32>
      %cst_31 = arith.constant dense<0.000000e+00> : vector<8xf32>
      %62 = vector.multi_reduction <add>, %61, %cst_31 [1] : vector<8x8xf32> to vector<8xf32>
      %63 = vector.shape_cast %62 : vector<8xf32> to vector<8x1xf32>
      %64 = tpu.reciprocal %63 {approx = true} : vector<8x1xf32> -> vector<8x1xf32>
      %65 = vector.broadcast %64 : vector<8x1xf32> to vector<8x8xf32>
      %66 = arith.mulf %61, %65 : vector<8x8xf32>
      %67 = arith.truncf %66 : vector<8x8xf32> to vector<8x8xbf16>
      %cst_32 = arith.constant dense<0.000000e+00> : vector<8x8xf32>
      %68 = tpu.matmul %67, %55, %cst_32 {dimension_numbers = #tpu.dot_dimension_numbers<[1], [0], [0], [1], [0, 0, 1, 1], [], []>} : vector<8x8xbf16>, vector<8x8xbf16>, vector<8x8xf32> -> vector<8x8xf32>
      %c0_33 = arith.constant 0 : index
      %c8 = arith.constant 8 : index
      %69 = vector.load %arg20[%c0_33, %c8] : memref<8x32xf32, #tpu.memory_space<vmem>>, vector<8x8xf32>
      tpu.vector_store %arg20[%c0_33, %c8], %68 {strides = array<i32>} : memref<8x32xf32, #tpu.memory_space<vmem>>, vector<8x8xf32>,
      %70 = vector.extract_strided_slice %15 {offsets = [0, 16], sizes = [8, 8], strides = [1, 1]} : vector<8x32xf32> to vector<8x8xf32>
      %71 = arith.truncf %70 : vector<8x8xf32> to vector<8x8xbf16>
      %72 = vector.extract_strided_slice %22 {offsets = [0, 16], sizes = [8, 8], strides = [1, 1]} : vector<8x32xf32> to vector<8x8xf32>
      %73 = arith.truncf %72 : vector<8x8xf32> to vector<8x8xbf16>
      %74 = vector.extract_strided_slice %29 {offsets = [0, 16], sizes = [8, 8], strides = [1, 1]} : vector<8x32xf32> to vector<8x8xf32>
      %75 = arith.truncf %74 : vector<8x8xf32> to vector<8x8xbf16>
      %cst_34 = arith.constant dense<0.000000e+00> : vector<8x8xf32>
      %76 = tpu.matmul %71, %73, %cst_34 {dimension_numbers = #tpu.dot_dimension_numbers<[1], [1], [0], [0], [0, 0, 1, 0], [], []>} : vector<8x8xbf16>, vector<8x8xbf16>, vector<8x8xf32> -> vector<8x8xf32>
      %cst_35 = arith.constant dense<0xFF800000> : vector<8xf32>
      %77 = vector.multi_reduction <maximumf>, %76, %cst_35 [1] : vector<8x8xf32> to vector<8xf32>
      %78 = vector.shape_cast %77 : vector<8xf32> to vector<8x1xf32>
      %79 = vector.broadcast %78 : vector<8x1xf32> to vector<8x8xf32>
      %80 = arith.subf %76, %79 : vector<8x8xf32>
      %81 = math.exp %80 : vector<8x8xf32>
      %cst_36 = arith.constant dense<0.000000e+00> : vector<8xf32>
      %82 = vector.multi_reduction <add>, %81, %cst_36 [1] : vector<8x8xf32> to vector<8xf32>
      %83 = vector.shape_cast %82 : vector<8xf32> to vector<8x1xf32>
      %84 = tpu.reciprocal %83 {approx = true} : vector<8x1xf32> -> vector<8x1xf32>
      %85 = vector.broadcast %84 : vector<8x1xf32> to vector<8x8xf32>
      %86 = arith.mulf %81, %85 : vector<8x8xf32>
      %87 = arith.truncf %86 : vector<8x8xf32> to vector<8x8xbf16>
      %cst_37 = arith.constant dense<0.000000e+00> : vector<8x8xf32>
      %88 = tpu.matmul %87, %75, %cst_37 {dimension_numbers = #tpu.dot_dimension_numbers<[1], [0], [0], [1], [0, 0, 1, 1], [], []>} : vector<8x8xbf16>, vector<8x8xbf16>, vector<8x8xf32> -> vector<8x8xf32>
      %c0_38 = arith.constant 0 : index
      %c16 = arith.constant 16 : index
      %89 = vector.load %arg20[%c0_38, %c16] : memref<8x32xf32, #tpu.memory_space<vmem>>, vector<8x8xf32>
      tpu.vector_store %arg20[%c0_38, %c16], %88 {strides = array<i32>} : memref<8x32xf32, #tpu.memory_space<vmem>>, vector<8x8xf32>,
      %90 = vector.extract_strided_slice %15 {offsets = [0, 24], sizes = [8, 8], strides = [1, 1]} : vector<8x32xf32> to vector<8x8xf32>
      %91 = arith.truncf %90 : vector<8x8xf32> to vector<8x8xbf16>
      %92 = vector.extract_strided_slice %22 {offsets = [0, 24], sizes = [8, 8], strides = [1, 1]} : vector<8x32xf32> to vector<8x8xf32>
      %93 = arith.truncf %92 : vector<8x8xf32> to vector<8x8xbf16>
      %94 = vector.extract_strided_slice %29 {offsets = [0, 24], sizes = [8, 8], strides = [1, 1]} : vector<8x32xf32> to vector<8x8xf32>
      %95 = arith.truncf %94 : vector<8x8xf32> to vector<8x8xbf16>
      %cst_39 = arith.constant dense<0.000000e+00> : vector<8x8xf32>
      %96 = tpu.matmul %91, %93, %cst_39 {dimension_numbers = #tpu.dot_dimension_numbers<[1], [1], [0], [0], [0, 0, 1, 0], [], []>} : vector<8x8xbf16>, vector<8x8xbf16>, vector<8x8xf32> -> vector<8x8xf32>
      %cst_40 = arith.constant dense<0xFF800000> : vector<8xf32>
      %97 = vector.multi_reduction <maximumf>, %96, %cst_40 [1] : vector<8x8xf32> to vector<8xf32>
      %98 = vector.shape_cast %97 : vector<8xf32> to vector<8x1xf32>
      %99 = vector.broadcast %98 : vector<8x1xf32> to vector<8x8xf32>
      %100 = arith.subf %96, %99 : vector<8x8xf32>
      %101 = math.exp %100 : vector<8x8xf32>
      %cst_41 = arith.constant dense<0.000000e+00> : vector<8xf32>
      %102 = vector.multi_reduction <add>, %101, %cst_41 [1] : vector<8x8xf32> to vector<8xf32>
      %103 = vector.shape_cast %102 : vector<8xf32> to vector<8x1xf32>
      %104 = tpu.reciprocal %103 {approx = true} : vector<8x1xf32> -> vector<8x1xf32>
      %105 = vector.broadcast %104 : vector<8x1xf32> to vector<8x8xf32>
      %106 = arith.mulf %101, %105 : vector<8x8xf32>
      %107 = arith.truncf %106 : vector<8x8xf32> to vector<8x8xbf16>
      %cst_42 = arith.constant dense<0.000000e+00> : vector<8x8xf32>
      %108 = tpu.matmul %107, %95, %cst_42 {dimension_numbers = #tpu.dot_dimension_numbers<[1], [0], [0], [1], [0, 0, 1, 1], [], []>} : vector<8x8xbf16>, vector<8x8xbf16>, vector<8x8xf32> -> vector<8x8xf32>
      %c0_43 = arith.constant 0 : index
      %c24 = arith.constant 24 : index
      %109 = vector.load %arg20[%c0_43, %c24] : memref<8x32xf32, #tpu.memory_space<vmem>>, vector<8x8xf32>
      tpu.vector_store %arg20[%c0_43, %c24], %108 {strides = array<i32>} : memref<8x32xf32, #tpu.memory_space<vmem>>, vector<8x8xf32>,
      %c0_44 = arith.constant 0 : index
      %c0_45 = arith.constant 0 : index
      %110 = vector.load %arg20[%c0_44, %c0_45] : memref<8x32xf32, #tpu.memory_space<vmem>>, vector<8x32xf32>
      %111 = arith.truncf %110 : vector<8x32xf32> to vector<8x32xbf16>
      %c0_46 = arith.constant 0 : index
      %c0_47 = arith.constant 0 : index
      %c0_48 = arith.constant 0 : index
      %112 = vector.load %arg9[%c0_46, %c0_47, %c0_48] : memref<1x32x32xbf16, #tpu.memory_space<vmem>>, vector<1x32x32xbf16>
      %113 = vector.shape_cast %112 : vector<1x32x32xbf16> to vector<32x32xbf16>
      %cst_49 = arith.constant dense<0.000000e+00> : vector<8x32xf32>
      %114 = tpu.matmul %111, %113, %cst_49 {dimension_numbers = #tpu.dot_dimension_numbers<[1], [0], [0], [1], [0, 0, 1, 1], [], []>} : vector<8x32xbf16>, vector<32x32xbf16>, vector<8x32xf32> -> vector<8x32xf32>
      %c0_50 = arith.constant 0 : index
      %c0_51 = arith.constant 0 : index
      %c0_52 = arith.constant 0 : index
      %115 = vector.load %arg10[%c0_50, %c0_51, %c0_52] : memref<1x1x32xf32, #tpu.memory_space<vmem>>, vector<1x1x32xf32>
      %116 = vector.shape_cast %115 : vector<1x1x32xf32> to vector<1x32xf32>
      %117 = vector.broadcast %116 : vector<1x32xf32> to vector<8x32xf32>
      %118 = arith.addf %114, %117 : vector<8x32xf32>
      %119 = arith.addf %7, %118 : vector<8x32xf32>
      %cst_53 = arith.constant dense<0.000000e+00> : vector<8xf32>
      %120 = vector.multi_reduction <add>, %119, %cst_53 [1] : vector<8x32xf32> to vector<8xf32>
      %121 = vector.shape_cast %120 : vector<8xf32> to vector<8x1xf32>
      %cst_54 = arith.constant 3.200000e+01 : f32
      %122 = vector.broadcast %cst_54 : f32 to vector<8x1xf32>
      %123 = arith.divf %121, %122 : vector<8x1xf32>
      %124 = vector.broadcast %123 : vector<8x1xf32> to vector<8x32xf32>
      %125 = arith.subf %119, %124 : vector<8x32xf32>
      %126 = arith.mulf %125, %125 : vector<8x32xf32>
      %cst_55 = arith.constant dense<0.000000e+00> : vector<8xf32>
      %127 = vector.multi_reduction <add>, %126, %cst_55 [1] : vector<8x32xf32> to vector<8xf32>
      %128 = vector.shape_cast %127 : vector<8xf32> to vector<8x1xf32>
      %cst_56 = arith.constant 3.200000e+01 : f32
      %129 = vector.broadcast %cst_56 : f32 to vector<8x1xf32>
      %130 = arith.divf %128, %129 : vector<8x1xf32>
      %131 = vector.broadcast %123 : vector<8x1xf32> to vector<8x32xf32>
      %132 = arith.subf %119, %131 : vector<8x32xf32>
      %cst_57 = arith.constant 9.99999996E-13 : f32
      %133 = vector.broadcast %cst_57 : f32 to vector<8x1xf32>
      %134 = arith.addf %130, %133 : vector<8x1xf32>
      %135 = math.rsqrt %134 : vector<8x1xf32>
      %136 = vector.broadcast %135 : vector<8x1xf32> to vector<8x32xf32>
      %137 = arith.mulf %132, %136 : vector<8x32xf32>
      %c0_58 = arith.constant 0 : index
      %c0_59 = arith.constant 0 : index
      %c0_60 = arith.constant 0 : index
      %138 = vector.load %arg11[%c0_58, %c0_59, %c0_60] : memref<1x1x32xf32, #tpu.memory_space<vmem>>, vector<1x1x32xf32>
      %139 = vector.shape_cast %138 : vector<1x1x32xf32> to vector<1x32xf32>
      %140 = vector.broadcast %139 : vector<1x32xf32> to vector<8x32xf32>
      %141 = arith.mulf %137, %140 : vector<8x32xf32>
      %c0_61 = arith.constant 0 : index
      %c0_62 = arith.constant 0 : index
      %c0_63 = arith.constant 0 : index
      %142 = vector.load %arg12[%c0_61, %c0_62, %c0_63] : memref<1x1x32xf32, #tpu.memory_space<vmem>>, vector<1x1x32xf32>
      %143 = vector.shape_cast %142 : vector<1x1x32xf32> to vector<1x32xf32>
      %144 = vector.broadcast %143 : vector<1x32xf32> to vector<8x32xf32>
      %145 = arith.addf %141, %144 : vector<8x32xf32>
      %146 = arith.truncf %145 : vector<8x32xf32> to vector<8x32xbf16>
      %c0_64 = arith.constant 0 : index
      %c0_65 = arith.constant 0 : index
      %c0_66 = arith.constant 0 : index
      %147 = vector.load %arg13[%c0_64, %c0_65, %c0_66] : memref<1x32x64xbf16, #tpu.memory_space<vmem>>, vector<1x32x64xbf16>
      %148 = vector.shape_cast %147 : vector<1x32x64xbf16> to vector<32x64xbf16>
      %cst_67 = arith.constant dense<0.000000e+00> : vector<8x64xf32>
      %149 = tpu.matmul %146, %148, %cst_67 {dimension_numbers = #tpu.dot_dimension_numbers<[1], [0], [0], [1], [0, 0, 1, 1], [], []>} : vector<8x32xbf16>, vector<32x64xbf16>, vector<8x64xf32> -> vector<8x64xf32>
      %c0_68 = arith.constant 0 : index
      %c0_69 = arith.constant 0 : index
      %c0_70 = arith.constant 0 : index
      %150 = vector.load %arg14[%c0_68, %c0_69, %c0_70] : memref<1x1x64xf32, #tpu.memory_space<vmem>>, vector<1x1x64xf32>
      %151 = vector.shape_cast %150 : vector<1x1x64xf32> to vector<1x64xf32>
      %152 = vector.broadcast %151 : vector<1x64xf32> to vector<8x64xf32>
      %153 = arith.addf %149, %152 : vector<8x64xf32>
      %cst_71 = arith.constant 0.000000e+00 : f32
      %154 = vector.broadcast %cst_71 : f32 to vector<8x64xf32>
      %155 = arith.maximumf %153, %154 : vector<8x64xf32>
      %156 = arith.truncf %155 : vector<8x64xf32> to vector<8x64xbf16>
      %c0_72 = arith.constant 0 : index
      %c0_73 = arith.constant 0 : index
      %c0_74 = arith.constant 0 : index
      %157 = vector.load %arg15[%c0_72, %c0_73, %c0_74] : memref<1x64x32xbf16, #tpu.memory_space<vmem>>, vector<1x64x32xbf16>
      %158 = vector.shape_cast %157 : vector<1x64x32xbf16> to vector<64x32xbf16>
      %cst_75 = arith.constant dense<0.000000e+00> : vector<8x32xf32>
      %159 = tpu.matmul %156, %158, %cst_75 {dimension_numbers = #tpu.dot_dimension_numbers<[1], [0], [0], [1], [0, 0, 1, 1], [], []>} : vector<8x64xbf16>, vector<64x32xbf16>, vector<8x32xf32> -> vector<8x32xf32>
      %c0_76 = arith.constant 0 : index
      %c0_77 = arith.constant 0 : index
      %c0_78 = arith.constant 0 : index
      %160 = vector.load %arg16[%c0_76, %c0_77, %c0_78] : memref<1x1x32xf32, #tpu.memory_space<vmem>>, vector<1x1x32xf32>
      %161 = vector.shape_cast %160 : vector<1x1x32xf32> to vector<1x32xf32>
      %162 = vector.broadcast %161 : vector<1x32xf32> to vector<8x32xf32>
      %163 = arith.addf %159, %162 : vector<8x32xf32>
      %164 = arith.addf %145, %163 : vector<8x32xf32>
      %cst_79 = arith.constant dense<0.000000e+00> : vector<8xf32>
      %165 = vector.multi_reduction <add>, %164, %cst_79 [1] : vector<8x32xf32> to vector<8xf32>
      %166 = vector.shape_cast %165 : vector<8xf32> to vector<8x1xf32>
      %cst_80 = arith.constant 3.200000e+01 : f32
      %167 = vector.broadcast %cst_80 : f32 to vector<8x1xf32>
      %168 = arith.divf %166, %167 : vector<8x1xf32>
      %169 = vector.broadcast %168 : vector<8x1xf32> to vector<8x32xf32>
      %170 = arith.subf %164, %169 : vector<8x32xf32>
      %171 = arith.mulf %170, %170 : vector<8x32xf32>
      %cst_81 = arith.constant dense<0.000000e+00> : vector<8xf32>
      %172 = vector.multi_reduction <add>, %171, %cst_81 [1] : vector<8x32xf32> to vector<8xf32>
      %173 = vector.shape_cast %172 : vector<8xf32> to vector<8x1xf32>
      %cst_82 = arith.constant 3.200000e+01 : f32
      %174 = vector.broadcast %cst_82 : f32 to vector<8x1xf32>
      %175 = arith.divf %173, %174 : vector<8x1xf32>
      %176 = vector.broadcast %168 : vector<8x1xf32> to vector<8x32xf32>
      %177 = arith.subf %164, %176 : vector<8x32xf32>
      %cst_83 = arith.constant 9.99999996E-13 : f32
      %178 = vector.broadcast %cst_83 : f32 to vector<8x1xf32>
      %179 = arith.addf %175, %178 : vector<8x1xf32>
      %180 = math.rsqrt %179 : vector<8x1xf32>
      %181 = vector.broadcast %180 : vector<8x1xf32> to vector<8x32xf32>
      %182 = arith.mulf %177, %181 : vector<8x32xf32>
      %c0_84 = arith.constant 0 : index
      %c0_85 = arith.constant 0 : index
      %c0_86 = arith.constant 0 : index
      %183 = vector.load %arg17[%c0_84, %c0_85, %c0_86] : memref<1x1x32xf32, #tpu.memory_space<vmem>>, vector<1x1x32xf32>
      %184 = vector.shape_cast %183 : vector<1x1x32xf32> to vector<1x32xf32>
      %185 = vector.broadcast %184 : vector<1x32xf32> to vector<8x32xf32>
      %186 = arith.mulf %182, %185 : vector<8x32xf32>
      %c0_87 = arith.constant 0 : index
      %c0_88 = arith.constant 0 : index
      %c0_89 = arith.constant 0 : index
      %187 = vector.load %arg18[%c0_87, %c0_88, %c0_89] : memref<1x1x32xf32, #tpu.memory_space<vmem>>, vector<1x1x32xf32>
      %188 = vector.shape_cast %187 : vector<1x1x32xf32> to vector<1x32xf32>
      %189 = vector.broadcast %188 : vector<1x32xf32> to vector<8x32xf32>
      %190 = arith.addf %186, %189 : vector<8x32xf32>
      %191 = arith.index_cast %5 : i32 to index
      %c0_90 = arith.constant 0 : index
      %192 = vector.load %arg19[%191, %c0_90] : memref<16x32xf32, #tpu.memory_space<vmem>>, vector<8x32xf32>
      tpu.vector_store %arg19[%191, %c0_90], %190 {strides = array<i32>} : memref<16x32xf32, #tpu.memory_space<vmem>>, vector<8x32xf32>,
    }
    %c2_i32_2 = arith.constant 2 : i32
    return
  }
  func.func @transform_0(%arg0: i32, %arg1: i32) -> (i32, i32) {
    %c0_i32 = arith.constant 0 : i32
    %c0_i32_0 = arith.constant 0 : i32
    return %arg0, %c0_i32 : i32, i32
  }
  func.func @transform_1(%arg0: i32, %arg1: i32) -> (i32, i32, i32) {
    %c0_i32 = arith.constant 0 : i32
    %c0_i32_0 = arith.constant 0 : i32
    %c0_i32_1 = arith.constant 0 : i32
    return %arg1, %c0_i32, %c0_i32_0 : i32, i32, i32
  }
  func.func @transform_2(%arg0: i32, %arg1: i32) -> (i32, i32, i32) {
    %c0_i32 = arith.constant 0 : i32
    %c0_i32_0 = arith.constant 0 : i32
    %c0_i32_1 = arith.constant 0 : i32
    return %arg1, %c0_i32, %c0_i32_0 : i32, i32, i32
  }
  func.func @transform_3(%arg0: i32, %arg1: i32) -> (i32, i32, i32) {
    %c0_i32 = arith.constant 0 : i32
    %c0_i32_0 = arith.constant 0 : i32
    %c0_i32_1 = arith.constant 0 : i32
    return %arg1, %c0_i32, %c0_i32_0 : i32, i32, i32
  }
  func.func @transform_4(%arg0: i32, %arg1: i32) -> (i32, i32, i32) {
    %c0_i32 = arith.constant 0 : i32
    %c0_i32_0 = arith.constant 0 : i32
    %c0_i32_1 = arith.constant 0 : i32
    return %arg1, %c0_i32, %c0_i32_0 : i32, i32, i32
  }
  func.func @transform_5(%arg0: i32, %arg1: i32) -> (i32, i32, i32) {
    %c0_i32 = arith.constant 0 : i32
    %c0_i32_0 = arith.constant 0 : i32
    %c0_i32_1 = arith.constant 0 : i32
    return %arg1, %c0_i32, %c0_i32_0 : i32, i32, i32
  }
  func.func @transform_6(%arg0: i32, %arg1: i32) -> (i32, i32, i32) {
    %c0_i32 = arith.constant 0 : i32
    %c0_i32_0 = arith.constant 0 : i32
    %c0_i32_1 = arith.constant 0 : i32
    return %arg1, %c0_i32, %c0_i32_0 : i32, i32, i32
  }
  func.func @transform_7(%arg0: i32, %arg1: i32) -> (i32, i32, i32) {
    %c0_i32 = arith.constant 0 : i32
    %c0_i32_0 = arith.constant 0 : i32
    %c0_i32_1 = arith.constant 0 : i32
    return %arg1, %c0_i32, %c0_i32_0 : i32, i32, i32
  }
  func.func @transform_8(%arg0: i32, %arg1: i32) -> (i32, i32, i32) {
    %c0_i32 = arith.constant 0 : i32
    %c0_i32_0 = arith.constant 0 : i32
    %c0_i32_1 = arith.constant 0 : i32
    return %arg1, %c0_i32, %c0_i32_0 : i32, i32, i32
  }
  func.func @transform_9(%arg0: i32, %arg1: i32) -> (i32, i32, i32) {
    %c0_i32 = arith.constant 0 : i32
    %c0_i32_0 = arith.constant 0 : i32
    %c0_i32_1 = arith.constant 0 : i32
    return %arg1, %c0_i32, %c0_i32_0 : i32, i32, i32
  }
  func.func @transform_10(%arg0: i32, %arg1: i32) -> (i32, i32, i32) {
    %c0_i32 = arith.constant 0 : i32
    %c0_i32_0 = arith.constant 0 : i32
    %c0_i32_1 = arith.constant 0 : i32
    return %arg1, %c0_i32, %c0_i32_0 : i32, i32, i32
  }
  func.func @transform_11(%arg0: i32, %arg1: i32) -> (i32, i32, i32) {
    %c0_i32 = arith.constant 0 : i32
    %c0_i32_0 = arith.constant 0 : i32
    %c0_i32_1 = arith.constant 0 : i32
    return %arg1, %c0_i32, %c0_i32_0 : i32, i32, i32
  }
  func.func @transform_12(%arg0: i32, %arg1: i32) -> (i32, i32, i32) {
    %c0_i32 = arith.constant 0 : i32
    %c0_i32_0 = arith.constant 0 : i32
    %c0_i32_1 = arith.constant 0 : i32
    return %arg1, %c0_i32, %c0_i32_0 : i32, i32, i32
  }
  func.func @transform_13(%arg0: i32, %arg1: i32) -> (i32, i32, i32) {
    %c0_i32 = arith.constant 0 : i32
    %c0_i32_0 = arith.constant 0 : i32
    %c0_i32_1 = arith.constant 0 : i32
    return %arg1, %c0_i32, %c0_i32_0 : i32, i32, i32
  }
  func.func @transform_14(%arg0: i32, %arg1: i32) -> (i32, i32, i32) {
    %c0_i32 = arith.constant 0 : i32
    %c0_i32_0 = arith.constant 0 : i32
    %c0_i32_1 = arith.constant 0 : i32
    return %arg1, %c0_i32, %c0_i32_0 : i32, i32, i32
  }
  func.func @transform_15(%arg0: i32, %arg1: i32) -> (i32, i32, i32) {
    %c0_i32 = arith.constant 0 : i32
    %c0_i32_0 = arith.constant 0 : i32
    %c0_i32_1 = arith.constant 0 : i32
    return %arg1, %c0_i32, %c0_i32_0 : i32, i32, i32
  }
  func.func @transform_16(%arg0: i32, %arg1: i32) -> (i32, i32, i32) {
    %c0_i32 = arith.constant 0 : i32
    %c0_i32_0 = arith.constant 0 : i32
    %c0_i32_1 = arith.constant 0 : i32
    return %arg1, %c0_i32, %c0_i32_0 : i32, i32, i32
  }
  func.func @transform_17(%arg0: i32, %arg1: i32) -> (i32, i32) {
    %c0_i32 = arith.constant 0 : i32
    %c0_i32_0 = arith.constant 0 : i32
    return %arg0, %c0_i32 : i32, i32
  }
}

</mosaic_0001>

<llo_original>
// kernel: tpu_custom_call.1
$region0: #{tpu_custom_call.1}
  #allocation0 [shape = 'u32[]', space=smem, size = 0x4, offset = 0x4, fixed_abs, tag = 'smem constant byte address 0x4 - core index']
  #allocation1 [shape = 'u32[144,128]{1,0:T(1,128)}', space=vmem, size = 0x12000, scoped, tag = 'internal scratch']
  #allocation2 [shape = 'f32[8,32]{1,0:T(8,128)}', space=vmem, size = 0x1000, scoped, tag = 'scratch operand']
  %s0 = inlined_call_operand.hbm [shape: f32[16,32], index: 0, kind: input, shape index: {}]
  %s1 = inlined_call_operand.vmem [shape: bf16[2,32,32], index: 1, kind: input, shape index: {}]
  %s2 = inlined_call_operand.vmem [shape: f32[2,1,32], index: 2, kind: input, shape index: {}]
  %s3 = inlined_call_operand.vmem [shape: bf16[2,32,32], index: 3, kind: input, shape index: {}]
  %s4 = inlined_call_operand.vmem [shape: f32[2,1,32], index: 4, kind: input, shape index: {}]
  %s5 = inlined_call_operand.vmem [shape: bf16[2,32,32], index: 5, kind: input, shape index: {}]
  %s6 = inlined_call_operand.vmem [shape: f32[2,1,32], index: 6, kind: input, shape index: {}]
  %s7 = inlined_call_operand.hbm [shape: bf16[2,32,32], index: 7, kind: input, shape index: {}]
  %s8 = inlined_call_operand.vmem [shape: f32[2,1,32], index: 8, kind: input, shape index: {}]
  %s9 = inlined_call_operand.vmem [shape: f32[2,1,32], index: 9, kind: input, shape index: {}]
  %s10 = inlined_call_operand.vmem [shape: f32[2,1,32], index: 10, kind: input, shape index: {}]
  %s11 = inlined_call_operand.hbm [shape: bf16[2,32,64], index: 11, kind: input, shape index: {}]
  %s12 = inlined_call_operand.vmem [shape: f32[2,1,64], index: 12, kind: input, shape index: {}]
  %s13 = inlined_call_operand.vmem [shape: bf16[2,64,32], index: 13, kind: input, shape index: {}]
  %s14 = inlined_call_operand.vmem [shape: f32[2,1,32], index: 14, kind: input, shape index: {}]
  %s15 = inlined_call_operand.vmem [shape: f32[2,1,32], index: 15, kind: input, shape index: {}]
  %s16 = inlined_call_operand.vmem [shape: f32[2,1,32], index: 16, kind: input, shape index: {}]
  %s17 = inlined_call_operand.hbm [shape: f32[16,32], index: 17, kind: output, shape index: {}]
  %s18 = sld [smem:[#allocation0]]
  $region124: #{tpu_custom_call.1} parent=0
    _
  %s20 = ssub.s32 1, %s18
  %s21 = scalar_select 0, %s20, %s18
  $region1: #{tpu_custom_call.1} parent=0
    #allocation3 [shape = 'u8[8192]{0}', space=vmem, size = 0x2000, scoped, tag = 'input window, operand 0, single buffered']
    #allocation4 [shape = 's32[2]{0}', space=sflag, size = 0x8, scoped, tag = 'scoped memory for tpu_custom_call.1']
    #allocation5 [shape = 's32[2]{0}', space=sflag, size = 0x8, scoped, tag = 'scoped memory for tpu_custom_call.1']
    #allocation6 [shape = 'u8[16384]{0}', space=vmem, size = 0x4000, scoped, tag = 'input window, operand 7']
    #allocation7 [shape = 's32[2]{0}', space=sflag, size = 0x8, scoped, tag = 'scoped memory for tpu_custom_call.1']
    #allocation8 [shape = 'u8[16384]{0}', space=vmem, size = 0x4000, scoped, tag = 'input window, operand 11']
    #allocation9 [shape = 'u8[8192]{0}', space=vmem, size = 0x2000, scoped, tag = 'output window, operand 0, single buffered']
    %22 = vsyncpa [#allocation4], 0
    %23 = vsyncpa [#allocation7], 0
    %s24 = scalar_lea.sflag [#allocation7], 1
    %25 = vsyncpa %s24, 0
    %26 = vsyncpa [#allocation5], 0
    loop: start=0, step=1, limit=4
    $region2: #{tpu_custom_call.1} parent=1 // loop_pre_header
      _
    $region3: #{tpu_custom_call.1} parent=1 // loop_header
      %s28 = sphi 0, %s32
      %p29 = scmp.ge.s32.totalorder %s28, 4
      %s35 = sphi 0, %s47
      %s36 = sphi 0, %s43
      %s37 = sphi 0, %s35
      %s38 = sphi 0, %s36
      %s39 = sphi 0, %s37
      %s40 = sphi 0, %s38
      %s50 = sphi 0, %s52
      %s53 = sphi 0, %s50
      %s54 = sphi 0, %s53
      %s70 = sphi 0, %s54
      %s76 = sphi 0, %s78
      %s79 = sphi 0, %s76
      %s80 = sphi 0, %s79
      %s96 = sphi 0, %s80
      %s102 = sphi 0, %s104
      %s105 = sphi 0, %s102
      %s106 = sphi 0, %s105
      %s122 = sphi 0, %s106
      %s128 = sphi 0, %s130
      %s131 = sphi 0, %s128
      %s132 = sphi 0, %s131
      %s148 = sphi 0, %s132
      %s154 = sphi 0, %s156
      %s157 = sphi 0, %s154
      %s158 = sphi 0, %s157
      %s174 = sphi 0, %s158
      %s180 = sphi 0, %s182
      %s183 = sphi 0, %s180
      %s184 = sphi 0, %s183
      %s200 = sphi 0, %s184
      %s206 = sphi 0, %s208
      %s209 = sphi 0, %s206
      %s210 = sphi 0, %s209
      %s226 = sphi 0, %s210
      %s232 = sphi 0, %s234
      %s235 = sphi 0, %s232
      %s236 = sphi 0, %s235
      %s252 = sphi 0, %s236
      %s258 = sphi 0, %s260
      %s261 = sphi 0, %s258
      %s262 = sphi 0, %s261
      %s278 = sphi 0, %s262
      %s284 = sphi 0, %s286
      %s287 = sphi 0, %s284
      %s288 = sphi 0, %s287
      %s304 = sphi 0, %s288
      %s310 = sphi 0, %s312
      %s313 = sphi 0, %s310
      %s314 = sphi 0, %s313
      %s330 = sphi 0, %s314
      %s336 = sphi 0, %s338
      %s339 = sphi 0, %s336
      %s340 = sphi 0, %s339
      %s356 = sphi 0, %s340
      %s362 = sphi 0, %s364
      %s365 = sphi 0, %s362
      %s366 = sphi 0, %s365
      %s382 = sphi 0, %s366
      %s388 = sphi 0, %s390
      %s391 = sphi 0, %s388
      %s392 = sphi 0, %s391
      %s408 = sphi 0, %s392
      %s414 = sphi 0, %s416
      %s417 = sphi 0, %s414
      %s418 = sphi 0, %s417
      %s434 = sphi 0, %s418
      %s440 = sphi 0, %s442
      %s443 = sphi 0, %s440
      %s444 = sphi 0, %s443
      %s460 = sphi 0, %s444
      %s466 = sphi 0, %s468
      %s469 = sphi 0, %s466
      %s470 = sphi 0, %s469
      %s486 = sphi 0, %s470
      %s492 = sphi 0, %s494
      %s495 = sphi 0, %s492
      %s496 = sphi 0, %s495
      %s512 = sphi 0, %s496
    $region4: #{tpu_custom_call.1} parent=1 // loop_header_branch
      %31 = sbr.rel (%p29) target = $region8
    $region5: #{tpu_custom_call.1} parent=1 // loop_body
      %s33 = ssub.s32 %s28, 1
      %s34 = ssub.s32 %s28, 2
      %s41 = sadd.s32 1, %s36
      %p42 = scmp.ge.s32.totalorder %s41, 2
      %s43 = scalar_select %p42, 0, %s41
      %s44 = sadd.s32 1, %s35
      %s45 = scalar_select %p42, %s44, %s35
      %p46 = scmp.ge.s32.totalorder %s45, 1
      %s47 = scalar_select %p46, 0, %s45
      %s48 = ssub.s32 %s35, %s47
      %p49 = scmp.eq.s32.totalorder %s48, 0
      %s51 = sadd.s32 %s50, 1
      %s52 = scalar_select %p49, %s50, %s51
      %p55 = pneg %p49
      %p56 = scmp.eq.s32.totalorder %s28, 1
      %p57 = por %p55, %p56
      %p58 = scmp.ne.s32.totalorder %s50, %s53
      %p59 = scmp.eq.s32.totalorder %s28, 0
      %p60 = por %p58, %p59
      %p61 = scmp.ne.s32.totalorder %s50, %s53
      %p62 = scmp.eq.s32.totalorder %s33, 1
      %p63 = por %p61, %p62
      %p64 = scmp.ne.s32.totalorder %s53, %s54
      %p65 = scmp.eq.s32.totalorder %s33, 0
      %p66 = por %p64, %p65
      %p67 = scmp.ne.s32.totalorder %s53, %s54
      %p68 = scmp.eq.s32.totalorder %s34, 1
      %p69 = por %p67, %p68
      %p71 = scmp.ne.s32.totalorder %s54, %s70
      %p72 = scmp.eq.s32.totalorder %s34, 0
      %p73 = por %p71, %p72
      %s74 = ssub.s32 %s36, %s43
      %p75 = scmp.eq.s32.totalorder %s74, 0
      %s77 = sadd.s32 %s76, 1
      %s78 = scalar_select %p75, %s76, %s77
      %p81 = pneg %p75
      %p82 = scmp.eq.s32.totalorder %s28, 1
      %p83 = por %p81, %p82
      %p84 = scmp.ne.s32.totalorder %s76, %s79
      %p85 = scmp.eq.s32.totalorder %s28, 0
      %p86 = por %p84, %p85
      %p87 = scmp.ne.s32.totalorder %s76, %s79
      %p88 = scmp.eq.s32.totalorder %s33, 1
      %p89 = por %p87, %p88
      %p90 = scmp.ne.s32.totalorder %s79, %s80
      %p91 = scmp.eq.s32.totalorder %s33, 0
      %p92 = por %p90, %p91
      %p93 = scmp.ne.s32.totalorder %s79, %s80
      %p94 = scmp.eq.s32.totalorder %s34, 1
      %p95 = por %p93, %p94
      %p97 = scmp.ne.s32.totalorder %s80, %s96
      %p98 = scmp.eq.s32.totalorder %s34, 0
      %p99 = por %p97, %p98
      %s100 = ssub.s32 %s36, %s43
      %p101 = scmp.eq.s32.totalorder %s100, 0
      %s103 = sadd.s32 %s102, 1
      %s104 = scalar_select %p101, %s102, %s103
      %p107 = pneg %p101
      %p108 = scmp.eq.s32.totalorder %s28, 1
      %p109 = por %p107, %p108
      %p110 = scmp.ne.s32.totalorder %s102, %s105
      %p111 = scmp.eq.s32.totalorder %s28, 0
      %p112 = por %p110, %p111
      %p113 = scmp.ne.s32.totalorder %s102, %s105
      %p114 = scmp.eq.s32.totalorder %s33, 1
      %p115 = por %p113, %p114
      %p116 = scmp.ne.s32.totalorder %s105, %s106
      %p117 = scmp.eq.s32.totalorder %s33, 0
      %p118 = por %p116, %p117
      %p119 = scmp.ne.s32.totalorder %s105, %s106
      %p120 = scmp.eq.s32.totalorder %s34, 1
      %p121 = por %p119, %p120
      %p123 = scmp.ne.s32.totalorder %s106, %s122
      %p124 = scmp.eq.s32.totalorder %s34, 0
      %p125 = por %p123, %p124
      %s126 = ssub.s32 %s36, %s43
      %p127 = scmp.eq.s32.totalorder %s126, 0
      %s129 = sadd.s32 %s128, 1
      %s130 = scalar_select %p127, %s128, %s129
      %p133 = pneg %p127
      %p134 = scmp.eq.s32.totalorder %s28, 1
      %p135 = por %p133, %p134
      %p136 = scmp.ne.s32.totalorder %s128, %s131
      %p137 = scmp.eq.s32.totalorder %s28, 0
      %p138 = por %p136, %p137
      %p139 = scmp.ne.s32.totalorder %s128, %s131
      %p140 = scmp.eq.s32.totalorder %s33, 1
      %p141 = por %p139, %p140
      %p142 = scmp.ne.s32.totalorder %s131, %s132
      %p143 = scmp.eq.s32.totalorder %s33, 0
      %p144 = por %p142, %p143
      %p145 = scmp.ne.s32.totalorder %s131, %s132
      %p146 = scmp.eq.s32.totalorder %s34, 1
      %p147 = por %p145, %p146
      %p149 = scmp.ne.s32.totalorder %s132, %s148
      %p150 = scmp.eq.s32.totalorder %s34, 0
      %p151 = por %p149, %p150
      %s152 = ssub.s32 %s36, %s43
      %p153 = scmp.eq.s32.totalorder %s152, 0
      %s155 = sadd.s32 %s154, 1
      %s156 = scalar_select %p153, %s154, %s155
      %p159 = pneg %p153
      %p160 = scmp.eq.s32.totalorder %s28, 1
      %p161 = por %p159, %p160
      %p162 = scmp.ne.s32.totalorder %s154, %s157
      %p163 = scmp.eq.s32.totalorder %s28, 0
      %p164 = por %p162, %p163
      %p165 = scmp.ne.s32.totalorder %s154, %s157
      %p166 = scmp.eq.s32.totalorder %s33, 1
      %p167 = por %p165, %p166
      %p168 = scmp.ne.s32.totalorder %s157, %s158
      %p169 = scmp.eq.s32.totalorder %s33, 0
      %p170 = por %p168, %p169
      %p171 = scmp.ne.s32.totalorder %s157, %s158
      %p172 = scmp.eq.s32.totalorder %s34, 1
      %p173 = por %p171, %p172
      %p175 = scmp.ne.s32.totalorder %s158, %s174
      %p176 = scmp.eq.s32.totalorder %s34, 0
      %p177 = por %p175, %p176
      %s178 = ssub.s32 %s36, %s43
      %p179 = scmp.eq.s32.totalorder %s178, 0
      %s181 = sadd.s32 %s180, 1
      %s182 = scalar_select %p179, %s180, %s181
      %p185 = pneg %p179
      %p186 = scmp.eq.s32.totalorder %s28, 1
      %p187 = por %p185, %p186
      %p188 = scmp.ne.s32.totalorder %s180, %s183
      %p189 = scmp.eq.s32.totalorder %s28, 0
      %p190 = por %p188, %p189
      %p191 = scmp.ne.s32.totalorder %s180, %s183
      %p192 = scmp.eq.s32.totalorder %s33, 1
      %p193 = por %p191, %p192
      %p194 = scmp.ne.s32.totalorder %s183, %s184
      %p195 = scmp.eq.s32.totalorder %s33, 0
      %p196 = por %p194, %p195
      %p197 = scmp.ne.s32.totalorder %s183, %s184
      %p198 = scmp.eq.s32.totalorder %s34, 1
      %p199 = por %p197, %p198
      %p201 = scmp.ne.s32.totalorder %s184, %s200
      %p202 = scmp.eq.s32.totalorder %s34, 0
      %p203 = por %p201, %p202
      %s204 = ssub.s32 %s36, %s43
      %p205 = scmp.eq.s32.totalorder %s204, 0
      %s207 = sadd.s32 %s206, 1
      %s208 = scalar_select %p205, %s206, %s207
      %p211 = pneg %p205
      %p212 = scmp.eq.s32.totalorder %s28, 1
      %p213 = por %p211, %p212
      %p214 = scmp.ne.s32.totalorder %s206, %s209
      %p215 = scmp.eq.s32.totalorder %s28, 0
      %p216 = por %p214, %p215
      %p217 = scmp.ne.s32.totalorder %s206, %s209
      %p218 = scmp.eq.s32.totalorder %s33, 1
      %p219 = por %p217, %p218
      %p220 = scmp.ne.s32.totalorder %s209, %s210
      %p221 = scmp.eq.s32.totalorder %s33, 0
      %p222 = por %p220, %p221
      %p223 = scmp.ne.s32.totalorder %s209, %s210
      %p224 = scmp.eq.s32.totalorder %s34, 1
      %p225 = por %p223, %p224
      %p227 = scmp.ne.s32.totalorder %s210, %s226
      %p228 = scmp.eq.s32.totalorder %s34, 0
      %p229 = por %p227, %p228
      %s230 = ssub.s32 %s36, %s43
      %p231 = scmp.eq.s32.totalorder %s230, 0
      %s233 = sadd.s32 %s232, 1
      %s234 = scalar_select %p231, %s232, %s233
      %p237 = pneg %p231
      %p238 = scmp.eq.s32.totalorder %s28, 1
      %p239 = por %p237, %p238
      %p240 = scmp.ne.s32.totalorder %s232, %s235
      %p241 = scmp.eq.s32.totalorder %s28, 0
      %p242 = por %p240, %p241
      %p243 = scmp.ne.s32.totalorder %s232, %s235
      %p244 = scmp.eq.s32.totalorder %s33, 1
      %p245 = por %p243, %p244
      %p246 = scmp.ne.s32.totalorder %s235, %s236
      %p247 = scmp.eq.s32.totalorder %s33, 0
      %p248 = por %p246, %p247
      %p249 = scmp.ne.s32.totalorder %s235, %s236
      %p250 = scmp.eq.s32.totalorder %s34, 1
      %p251 = por %p249, %p250
      %p253 = scmp.ne.s32.totalorder %s236, %s252
      %p254 = scmp.eq.s32.totalorder %s34, 0
      %p255 = por %p253, %p254
      %s256 = ssub.s32 %s36, %s43
      %p257 = scmp.eq.s32.totalorder %s256, 0
      %s259 = sadd.s32 %s258, 1
      %s260 = scalar_select %p257, %s258, %s259
      %p263 = pneg %p257
      %p264 = scmp.eq.s32.totalorder %s28, 1
      %p265 = por %p263, %p264
      %p266 = scmp.ne.s32.totalorder %s258, %s261
      %p267 = scmp.eq.s32.totalorder %s28, 0
      %p268 = por %p266, %p267
      %p269 = scmp.ne.s32.totalorder %s258, %s261
      %p270 = scmp.eq.s32.totalorder %s33, 1
      %p271 = por %p269, %p270
      %p272 = scmp.ne.s32.totalorder %s261, %s262
      %p273 = scmp.eq.s32.totalorder %s33, 0
      %p274 = por %p272, %p273
      %p275 = scmp.ne.s32.totalorder %s261, %s262
      %p276 = scmp.eq.s32.totalorder %s34, 1
      %p277 = por %p275, %p276
      %p279 = scmp.ne.s32.totalorder %s262, %s278
      %p280 = scmp.eq.s32.totalorder %s34, 0
      %p281 = por %p279, %p280
      %s282 = ssub.s32 %s36, %s43
      %p283 = scmp.eq.s32.totalorder %s282, 0
      %s285 = sadd.s32 %s284, 1
      %s286 = scalar_select %p283, %s284, %s285
      %p289 = pneg %p283
      %p290 = scmp.eq.s32.totalorder %s28, 1
      %p291 = por %p289, %p290
      %p292 = scmp.ne.s32.totalorder %s284, %s287
      %p293 = scmp.eq.s32.totalorder %s28, 0
      %p294 = por %p292, %p293
      %p295 = scmp.ne.s32.totalorder %s284, %s287
      %p296 = scmp.eq.s32.totalorder %s33, 1
      %p297 = por %p295, %p296
      %p298 = scmp.ne.s32.totalorder %s287, %s288
      %p299 = scmp.eq.s32.totalorder %s33, 0
      %p300 = por %p298, %p299
      %p301 = scmp.ne.s32.totalorder %s287, %s288
      %p302 = scmp.eq.s32.totalorder %s34, 1
      %p303 = por %p301, %p302
      %p305 = scmp.ne.s32.totalorder %s288, %s304
      %p306 = scmp.eq.s32.totalorder %s34, 0
      %p307 = por %p305, %p306
      %s308 = ssub.s32 %s36, %s43
      %p309 = scmp.eq.s32.totalorder %s308, 0
      %s311 = sadd.s32 %s310, 1
      %s312 = scalar_select %p309, %s310, %s311
      %p315 = pneg %p309
      %p316 = scmp.eq.s32.totalorder %s28, 1
      %p317 = por %p315, %p316
      %p318 = scmp.ne.s32.totalorder %s310, %s313
      %p319 = scmp.eq.s32.totalorder %s28, 0
      %p320 = por %p318, %p319
      %p321 = scmp.ne.s32.totalorder %s310, %s313
      %p322 = scmp.eq.s32.totalorder %s33, 1
      %p323 = por %p321, %p322
      %p324 = scmp.ne.s32.totalorder %s313, %s314
      %p325 = scmp.eq.s32.totalorder %s33, 0
      %p326 = por %p324, %p325
      %p327 = scmp.ne.s32.totalorder %s313, %s314
      %p328 = scmp.eq.s32.totalorder %s34, 1
      %p329 = por %p327, %p328
      %p331 = scmp.ne.s32.totalorder %s314, %s330
      %p332 = scmp.eq.s32.totalorder %s34, 0
      %p333 = por %p331, %p332
      %s334 = ssub.s32 %s36, %s43
      %p335 = scmp.eq.s32.totalorder %s334, 0
      %s337 = sadd.s32 %s336, 1
      %s338 = scalar_select %p335, %s336, %s337
      %p341 = pneg %p335
      %p342 = scmp.eq.s32.totalorder %s28, 1
      %p343 = por %p341, %p342
      %p344 = scmp.ne.s32.totalorder %s336, %s339
      %p345 = scmp.eq.s32.totalorder %s28, 0
      %p346 = por %p344, %p345
      %p347 = scmp.ne.s32.totalorder %s336, %s339
      %p348 = scmp.eq.s32.totalorder %s33, 1
      %p349 = por %p347, %p348
      %p350 = scmp.ne.s32.totalorder %s339, %s340
      %p351 = scmp.eq.s32.totalorder %s33, 0
      %p352 = por %p350, %p351
      %p353 = scmp.ne.s32.totalorder %s339, %s340
      %p354 = scmp.eq.s32.totalorder %s34, 1
      %p355 = por %p353, %p354
      %p357 = scmp.ne.s32.totalorder %s340, %s356
      %p358 = scmp.eq.s32.totalorder %s34, 0
      %p359 = por %p357, %p358
      %s360 = ssub.s32 %s36, %s43
      %p361 = scmp.eq.s32.totalorder %s360, 0
      %s363 = sadd.s32 %s362, 1
      %s364 = scalar_select %p361, %s362, %s363
      %p367 = pneg %p361
      %p368 = scmp.eq.s32.totalorder %s28, 1
      %p369 = por %p367, %p368
      %p370 = scmp.ne.s32.totalorder %s362, %s365
      %p371 = scmp.eq.s32.totalorder %s28, 0
      %p372 = por %p370, %p371
      %p373 = scmp.ne.s32.totalorder %s362, %s365
      %p374 = scmp.eq.s32.totalorder %s33, 1
      %p375 = por %p373, %p374
      %p376 = scmp.ne.s32.totalorder %s365, %s366
      %p377 = scmp.eq.s32.totalorder %s33, 0
      %p378 = por %p376, %p377
      %p379 = scmp.ne.s32.totalorder %s365, %s366
      %p380 = scmp.eq.s32.totalorder %s34, 1
      %p381 = por %p379, %p380
      %p383 = scmp.ne.s32.totalorder %s366, %s382
      %p384 = scmp.eq.s32.totalorder %s34, 0
      %p385 = por %p383, %p384
      %s386 = ssub.s32 %s36, %s43
      %p387 = scmp.eq.s32.totalorder %s386, 0
      %s389 = sadd.s32 %s388, 1
      %s390 = scalar_select %p387, %s388, %s389
      %p393 = pneg %p387
      %p394 = scmp.eq.s32.totalorder %s28, 1
      %p395 = por %p393, %p394
      %p396 = scmp.ne.s32.totalorder %s388, %s391
      %p397 = scmp.eq.s32.totalorder %s28, 0
      %p398 = por %p396, %p397
      %p399 = scmp.ne.s32.totalorder %s388, %s391
      %p400 = scmp.eq.s32.totalorder %s33, 1
      %p401 = por %p399, %p400
      %p402 = scmp.ne.s32.totalorder %s391, %s392
      %p403 = scmp.eq.s32.totalorder %s33, 0
      %p404 = por %p402, %p403
      %p405 = scmp.ne.s32.totalorder %s391, %s392
      %p406 = scmp.eq.s32.totalorder %s34, 1
      %p407 = por %p405, %p406
      %p409 = scmp.ne.s32.totalorder %s392, %s408
      %p410 = scmp.eq.s32.totalorder %s34, 0
      %p411 = por %p409, %p410
      %s412 = ssub.s32 %s36, %s43
      %p413 = scmp.eq.s32.totalorder %s412, 0
      %s415 = sadd.s32 %s414, 1
      %s416 = scalar_select %p413, %s414, %s415
      %p419 = pneg %p413
      %p420 = scmp.eq.s32.totalorder %s28, 1
      %p421 = por %p419, %p420
      %p422 = scmp.ne.s32.totalorder %s414, %s417
      %p423 = scmp.eq.s32.totalorder %s28, 0
      %p424 = por %p422, %p423
      %p425 = scmp.ne.s32.totalorder %s414, %s417
      %p426 = scmp.eq.s32.totalorder %s33, 1
      %p427 = por %p425, %p426
      %p428 = scmp.ne.s32.totalorder %s417, %s418
      %p429 = scmp.eq.s32.totalorder %s33, 0
      %p430 = por %p428, %p429
      %p431 = scmp.ne.s32.totalorder %s417, %s418
      %p432 = scmp.eq.s32.totalorder %s34, 1
      %p433 = por %p431, %p432
      %p435 = scmp.ne.s32.totalorder %s418, %s434
      %p436 = scmp.eq.s32.totalorder %s34, 0
      %p437 = por %p435, %p436
      %s438 = ssub.s32 %s36, %s43
      %p439 = scmp.eq.s32.totalorder %s438, 0
      %s441 = sadd.s32 %s440, 1
      %s442 = scalar_select %p439, %s440, %s441
      %p445 = pneg %p439
      %p446 = scmp.eq.s32.totalorder %s28, 1
      %p447 = por %p445, %p446
      %p448 = scmp.ne.s32.totalorder %s440, %s443
      %p449 = scmp.eq.s32.totalorder %s28, 0
      %p450 = por %p448, %p449
      %p451 = scmp.ne.s32.totalorder %s440, %s443
      %p452 = scmp.eq.s32.totalorder %s33, 1
      %p453 = por %p451, %p452
      %p454 = scmp.ne.s32.totalorder %s443, %s444
      %p455 = scmp.eq.s32.totalorder %s33, 0
      %p456 = por %p454, %p455
      %p457 = scmp.ne.s32.totalorder %s443, %s444
      %p458 = scmp.eq.s32.totalorder %s34, 1
      %p459 = por %p457, %p458
      %p461 = scmp.ne.s32.totalorder %s444, %s460
      %p462 = scmp.eq.s32.totalorder %s34, 0
      %p463 = por %p461, %p462
      %s464 = ssub.s32 %s36, %s43
      %p465 = scmp.eq.s32.totalorder %s464, 0
      %s467 = sadd.s32 %s466, 1
      %s468 = scalar_select %p465, %s466, %s467
      %p471 = pneg %p465
      %p472 = scmp.eq.s32.totalorder %s28, 1
      %p473 = por %p471, %p472
      %p474 = scmp.ne.s32.totalorder %s466, %s469
      %p475 = scmp.eq.s32.totalorder %s28, 0
      %p476 = por %p474, %p475
      %p477 = scmp.ne.s32.totalorder %s466, %s469
      %p478 = scmp.eq.s32.totalorder %s33, 1
      %p479 = por %p477, %p478
      %p480 = scmp.ne.s32.totalorder %s469, %s470
      %p481 = scmp.eq.s32.totalorder %s33, 0
      %p482 = por %p480, %p481
      %p483 = scmp.ne.s32.totalorder %s469, %s470
      %p484 = scmp.eq.s32.totalorder %s34, 1
      %p485 = por %p483, %p484
      %p487 = scmp.ne.s32.totalorder %s470, %s486
      %p488 = scmp.eq.s32.totalorder %s34, 0
      %p489 = por %p487, %p488
      %s490 = ssub.s32 %s35, %s47
      %p491 = scmp.eq.s32.totalorder %s490, 0
      %s493 = sadd.s32 %s492, 1
      %s494 = scalar_select %p491, %s492, %s493
      %p497 = pneg %p491
      %p498 = scmp.eq.s32.totalorder %s28, 1
      %p499 = por %p497, %p498
      %p500 = scmp.ne.s32.totalorder %s492, %s495
      %p501 = scmp.eq.s32.totalorder %s28, 0
      %p502 = por %p500, %p501
      %p503 = scmp.ne.s32.totalorder %s492, %s495
      %p504 = scmp.eq.s32.totalorder %s33, 1
      %p505 = por %p503, %p504
      %p506 = scmp.ne.s32.totalorder %s495, %s496
      %p507 = scmp.eq.s32.totalorder %s33, 0
      %p508 = por %p506, %p507
      %p509 = scmp.ne.s32.totalorder %s495, %s496
      %p510 = scmp.eq.s32.totalorder %s34, 1
      %p511 = por %p509, %p510
      %p513 = scmp.ne.s32.totalorder %s496, %s512
      %p514 = scmp.eq.s32.totalorder %s34, 0
      %p515 = por %p513, %p514
      %p516 = scmp.le.s32.totalorder 1, %s28
      %p517 = scmp.lt.s32.totalorder %s28, 3
      %p518 = pnand %p516, %p517
      %p519 = pneg %p518
      // Predicated region
      $region9: #{tpu_custom_call.1} parent=5 // pred_check
        _
      $region10: #{tpu_custom_call.1} parent=5 // pred_check_branch
        %521 = sbr.rel (%p518) target = $region12
      $region11: #{tpu_custom_call.1} parent=5 // pred_region
        %s522 = ssub.s32 %s28, 1
        // Predicated region
        $region13: #{tpu_custom_call.1} parent=11 // pred_check
          %p523 = pneg %p66
        $region14: #{tpu_custom_call.1} parent=11 // pred_check_branch
          %525 = sbr.rel (%p523) target = $region16
        $region15: #{tpu_custom_call.1} parent=11 // pred_region
          %s526 = smul.u32 2, %s37
          %s528 = ssub.s32 256, 256
          %529 = vsyncadd [#allocation4], %s528
          %s530 = smul.addr %s526, 128
          %s531 = scalar_lea.hbm %s0, %s530
          %s532 = sshll.u32 [#allocation3], 4
          %s533 = int_to_ptr.vmem [resolvable:$true] %s532
          %538 = dma.hbm_to_vmem [thread:$0]  %s531, 256, %s533, [#allocation4], 128, 128, 8
        $region16: #{tpu_custom_call.1} parent=11 // pred_fallthru
          _
      $region12: #{tpu_custom_call.1} parent=5 // pred_fallthru
        _
      %p539 = scmp.lt.s32.totalorder %s28, 2
      // Predicated region
      $region17: #{tpu_custom_call.1} parent=5 // pred_check
        %p540 = pneg %p539
      $region18: #{tpu_custom_call.1} parent=5 // pred_check_branch
        %542 = sbr.rel (%p540) target = $region20
      $region19: #{tpu_custom_call.1} parent=5 // pred_region
        // Predicated region
        $region21: #{tpu_custom_call.1} parent=19 // pred_check
          %p543 = pneg %p86
        $region22: #{tpu_custom_call.1} parent=19 // pred_check_branch
          %545 = sbr.rel (%p543) target = $region24
        $region23: #{tpu_custom_call.1} parent=19 // pred_region
          %p546 = scmp.lt.s32.totalorder %s36, 1
          %s547 = scalar_select %p546, %s36, 1
          %s548 = smul.addr %s547, 4
          %s549 = smul.addr %s548, 4
          %s550 = scalar_lea.vmem %s1, %s549
        $region24: #{tpu_custom_call.1} parent=19 // pred_fallthru
          _
        // Predicated region
        $region25: #{tpu_custom_call.1} parent=19 // pred_check
          %p551 = pneg %p112
        $region26: #{tpu_custom_call.1} parent=19 // pred_check_branch
          %553 = sbr.rel (%p551) target = $region28
        $region27: #{tpu_custom_call.1} parent=19 // pred_region
          %p554 = scmp.lt.s32.totalorder %s36, 1
          %s555 = scalar_select %p554, %s36, 1
          %s556 = scalar_lea.vmem %s2, %s555
        $region28: #{tpu_custom_call.1} parent=19 // pred_fallthru
          _
        // Predicated region
        $region29: #{tpu_custom_call.1} parent=19 // pred_check
          %p557 = pneg %p138
        $region30: #{tpu_custom_call.1} parent=19 // pred_check_branch
          %559 = sbr.rel (%p557) target = $region32
        $region31: #{tpu_custom_call.1} parent=19 // pred_region
          %p560 = scmp.lt.s32.totalorder %s36, 1
          %s561 = scalar_select %p560, %s36, 1
          %s562 = smul.addr %s561, 4
          %s563 = smul.addr %s562, 4
          %s564 = scalar_lea.vmem %s3, %s563
        $region32: #{tpu_custom_call.1} parent=19 // pred_fallthru
          _
        // Predicated region
        $region33: #{tpu_custom_call.1} parent=19 // pred_check
          %p565 = pneg %p164
        $region34: #{tpu_custom_call.1} parent=19 // pred_check_branch
          %567 = sbr.rel (%p565) target = $region36
        $region35: #{tpu_custom_call.1} parent=19 // pred_region
          %p568 = scmp.lt.s32.totalorder %s36, 1
          %s569 = scalar_select %p568, %s36, 1
          %s570 = scalar_lea.vmem %s4, %s569
        $region36: #{tpu_custom_call.1} parent=19 // pred_fallthru
          _
        // Predicated region
        $region37: #{tpu_custom_call.1} parent=19 // pred_check
          %p571 = pneg %p190
        $region38: #{tpu_custom_call.1} parent=19 // pred_check_branch
          %573 = sbr.rel (%p571) target = $region40
        $region39: #{tpu_custom_call.1} parent=19 // pred_region
          %p574 = scmp.lt.s32.totalorder %s36, 1
          %s575 = scalar_select %p574, %s36, 1
          %s576 = smul.addr %s575, 4
          %s577 = smul.addr %s576, 4
          %s578 = scalar_lea.vmem %s5, %s577
        $region40: #{tpu_custom_call.1} parent=19 // pred_fallthru
          _
        // Predicated region
        $region41: #{tpu_custom_call.1} parent=19 // pred_check
          %p579 = pneg %p216
        $region42: #{tpu_custom_call.1} parent=19 // pred_check_branch
          %581 = sbr.rel (%p579) target = $region44
        $region43: #{tpu_custom_call.1} parent=19 // pred_region
          %p582 = scmp.lt.s32.totalorder %s36, 1
          %s583 = scalar_select %p582, %s36, 1
          %s584 = scalar_lea.vmem %s6, %s583
        $region44: #{tpu_custom_call.1} parent=19 // pred_fallthru
          _
        // Predicated region
        $region45: #{tpu_custom_call.1} parent=19 // pred_check
          %p585 = pneg %p242
        $region46: #{tpu_custom_call.1} parent=19 // pred_check_branch
          %587 = sbr.rel (%p585) target = $region48
        $region47: #{tpu_custom_call.1} parent=19 // pred_region
          %s588 = sand.u32 %s28, 1
          %s589 = scalar_lea.sflag [#allocation7], %s588
          %s590 = sand.u32 %s232, 1
          %s591 = smul.addr %s590, 16
          %s592 = scalar_lea.vmem [#allocation6], %s591
          %s594 = ssub.s32 256, 256
          %595 = vsyncadd %s589, %s594
          %s596 = smul.addr %s36, 4
          %s597 = smul.addr %s596, 64
          %s598 = scalar_lea.hbm %s7, %s597
          %s599 = sshll.u32 %s592, 4
          %s600 = int_to_ptr.vmem [resolvable:$true] %s599
          %605 = dma.hbm_to_vmem [thread:$0]  %s598, 256, %s600, %s589, 64, 64, 4
        $region48: #{tpu_custom_call.1} parent=19 // pred_fallthru
          _
        // Predicated region
        $region49: #{tpu_custom_call.1} parent=19 // pred_check
          %p606 = pneg %p268
        $region50: #{tpu_custom_call.1} parent=19 // pred_check_branch
          %608 = sbr.rel (%p606) target = $region52
        $region51: #{tpu_custom_call.1} parent=19 // pred_region
          %p609 = scmp.lt.s32.totalorder %s36, 1
          %s610 = scalar_select %p609, %s36, 1
          %s611 = scalar_lea.vmem %s8, %s610
        $region52: #{tpu_custom_call.1} parent=19 // pred_fallthru
          _
        // Predicated region
        $region53: #{tpu_custom_call.1} parent=19 // pred_check
          %p612 = pneg %p294
        $region54: #{tpu_custom_call.1} parent=19 // pred_check_branch
          %614 = sbr.rel (%p612) target = $region56
        $region55: #{tpu_custom_call.1} parent=19 // pred_region
          %p615 = scmp.lt.s32.totalorder %s36, 1
          %s616 = scalar_select %p615, %s36, 1
          %s617 = scalar_lea.vmem %s9, %s616
        $region56: #{tpu_custom_call.1} parent=19 // pred_fallthru
          _
        // Predicated region
        $region57: #{tpu_custom_call.1} parent=19 // pred_check
          %p618 = pneg %p320
        $region58: #{tpu_custom_call.1} parent=19 // pred_check_branch
          %620 = sbr.rel (%p618) target = $region60
        $region59: #{tpu_custom_call.1} parent=19 // pred_region
          %p621 = scmp.lt.s32.totalorder %s36, 1
          %s622 = scalar_select %p621, %s36, 1
          %s623 = scalar_lea.vmem %s10, %s622
        $region60: #{tpu_custom_call.1} parent=19 // pred_fallthru
          _
        // Predicated region
        $region61: #{tpu_custom_call.1} parent=19 // pred_check
          %p624 = pneg %p346
        $region62: #{tpu_custom_call.1} parent=19 // pred_check_branch
          %626 = sbr.rel (%p624) target = $region64
        $region63: #{tpu_custom_call.1} parent=19 // pred_region
          %s627 = sand.u32 %s28, 1
          %s628 = scalar_lea.sflag [#allocation7], %s627
          %s629 = sand.u32 %s336, 1
          %s630 = smul.addr %s629, 16
          %s631 = scalar_lea.vmem [#allocation8], %s630
          %s633 = ssub.s32 256, 256
          %634 = vsyncadd %s628, %s633
          %s635 = smul.addr %s36, 4
          %s636 = smul.addr %s635, 64
          %s637 = scalar_lea.hbm %s11, %s636
          %s638 = sshll.u32 %s631, 4
          %s639 = int_to_ptr.vmem [resolvable:$true] %s638
          %644 = dma.hbm_to_vmem [thread:$0]  %s637, 256, %s639, %s628, 64, 64, 4
        $region64: #{tpu_custom_call.1} parent=19 // pred_fallthru
          _
        // Predicated region
        $region65: #{tpu_custom_call.1} parent=19 // pred_check
          %p645 = pneg %p372
        $region66: #{tpu_custom_call.1} parent=19 // pred_check_branch
          %647 = sbr.rel (%p645) target = $region68
        $region67: #{tpu_custom_call.1} parent=19 // pred_region
          %p648 = scmp.lt.s32.totalorder %s36, 1
          %s649 = scalar_select %p648, %s36, 1
          %s650 = scalar_lea.vmem %s12, %s649
        $region68: #{tpu_custom_call.1} parent=19 // pred_fallthru
          _
        // Predicated region
        $region69: #{tpu_custom_call.1} parent=19 // pred_check
          %p651 = pneg %p398
        $region70: #{tpu_custom_call.1} parent=19 // pred_check_branch
          %653 = sbr.rel (%p651) target = $region72
        $region71: #{tpu_custom_call.1} parent=19 // pred_region
          %p654 = scmp.lt.s32.totalorder %s36, 1
          %s655 = scalar_select %p654, %s36, 1
          %s656 = smul.addr %s655, 8
          %s657 = smul.addr %s656, 4
          %s658 = scalar_lea.vmem %s13, %s657
        $region72: #{tpu_custom_call.1} parent=19 // pred_fallthru
          _
        // Predicated region
        $region73: #{tpu_custom_call.1} parent=19 // pred_check
          %p659 = pneg %p424
        $region74: #{tpu_custom_call.1} parent=19 // pred_check_branch
          %661 = sbr.rel (%p659) target = $region76
        $region75: #{tpu_custom_call.1} parent=19 // pred_region
          %p662 = scmp.lt.s32.totalorder %s36, 1
          %s663 = scalar_select %p662, %s36, 1
          %s664 = scalar_lea.vmem %s14, %s663
        $region76: #{tpu_custom_call.1} parent=19 // pred_fallthru
          _
        // Predicated region
        $region77: #{tpu_custom_call.1} parent=19 // pred_check
          %p665 = pneg %p450
        $region78: #{tpu_custom_call.1} parent=19 // pred_check_branch
          %667 = sbr.rel (%p665) target = $region80
        $region79: #{tpu_custom_call.1} parent=19 // pred_region
          %p668 = scmp.lt.s32.totalorder %s36, 1
          %s669 = scalar_select %p668, %s36, 1
          %s670 = scalar_lea.vmem %s15, %s669
        $region80: #{tpu_custom_call.1} parent=19 // pred_fallthru
          _
        // Predicated region
        $region81: #{tpu_custom_call.1} parent=19 // pred_check
          %p671 = pneg %p476
        $region82: #{tpu_custom_call.1} parent=19 // pred_check_branch
          %673 = sbr.rel (%p671) target = $region84
        $region83: #{tpu_custom_call.1} parent=19 // pred_region
          %p674 = scmp.lt.s32.totalorder %s36, 1
          %s675 = scalar_select %p674, %s36, 1
          %s676 = scalar_lea.vmem %s16, %s675
        $region84: #{tpu_custom_call.1} parent=19 // pred_fallthru
          _
      $region20: #{tpu_custom_call.1} parent=5 // pred_fallthru
        _
      %p677 = scmp.le.s32.totalorder 1, %s28
      %p678 = scmp.lt.s32.totalorder %s28, 3
      %p679 = pnand %p677, %p678
      %p680 = pneg %p679
      // Predicated region
      $region85: #{tpu_custom_call.1} parent=5 // pred_check
        _
      $region86: #{tpu_custom_call.1} parent=5 // pred_check_branch
        %682 = sbr.rel (%p679) target = $region88
      $region87: #{tpu_custom_call.1} parent=5 // pred_region
        %s683 = ssub.s32 %s28, 1
        // Predicated region
        $region89: #{tpu_custom_call.1} parent=87 // pred_check
          %p684 = pneg %p66
        $region90: #{tpu_custom_call.1} parent=87 // pred_check_branch
          %686 = sbr.rel (%p684) target = $region92
        $region91: #{tpu_custom_call.1} parent=87 // pred_region
          %687 = dma.done [#allocation4], 256
        $region92: #{tpu_custom_call.1} parent=87 // pred_fallthru
          _
        %s688 = sand.u32 %s33, 1
        %s689 = scalar_lea.sflag [#allocation7], %s688
        %s690 = sand.u32 %s235, 1
        %s691 = smul.addr %s690, 16
        %s692 = scalar_lea.vmem [#allocation6], %s691
        // Predicated region
        $region93: #{tpu_custom_call.1} parent=87 // pred_check
          %p693 = pneg %p248
        $region94: #{tpu_custom_call.1} parent=87 // pred_check_branch
          %695 = sbr.rel (%p693) target = $region96
        $region95: #{tpu_custom_call.1} parent=87 // pred_region
          %696 = dma.done %s689, 256
        $region96: #{tpu_custom_call.1} parent=87 // pred_fallthru
          _
        %s697 = sand.u32 %s33, 1
        %s698 = scalar_lea.sflag [#allocation7], %s697
        %s699 = sand.u32 %s339, 1
        %s700 = smul.addr %s699, 16
        %s701 = scalar_lea.vmem [#allocation8], %s700
        // Predicated region
        $region97: #{tpu_custom_call.1} parent=87 // pred_check
          %p702 = pneg %p352
        $region98: #{tpu_custom_call.1} parent=87 // pred_check_branch
          %704 = sbr.rel (%p702) target = $region100
        $region99: #{tpu_custom_call.1} parent=87 // pred_region
          %705 = dma.done %s698, 256
        $region100: #{tpu_custom_call.1} parent=87 // pred_fallthru
          _
        %p706 = pneg %p66
        %p707 = pneg %p63
        %p708 = scmp.lt.s32.totalorder %s38, 1
        %s709 = scalar_select %p708, %s38, 1
        %s710 = smul.addr %s709, 4
        %s711 = smul.addr %s710, 4
        %s712 = scalar_lea.vmem %s1, %s711
        %p713 = pneg %p92
        %p714 = pneg %p89
        %p715 = scmp.lt.s32.totalorder %s38, 1
        %s716 = scalar_select %p715, %s38, 1
        %s717 = scalar_lea.vmem %s2, %s716
        %p718 = pneg %p118
        %p719 = pneg %p115
        %p720 = scmp.lt.s32.totalorder %s38, 1
        %s721 = scalar_select %p720, %s38, 1
        %s722 = smul.addr %s721, 4
        %s723 = smul.addr %s722, 4
        %s724 = scalar_lea.vmem %s3, %s723
        %p725 = pneg %p144
        %p726 = pneg %p141
        %p727 = scmp.lt.s32.totalorder %s38, 1
        %s728 = scalar_select %p727, %s38, 1
        %s729 = scalar_lea.vmem %s4, %s728
        %p730 = pneg %p170
        %p731 = pneg %p167
        %p732 = scmp.lt.s32.totalorder %s38, 1
        %s733 = scalar_select %p732, %s38, 1
        %s734 = smul.addr %s733, 4
        %s735 = smul.addr %s734, 4
        %s736 = scalar_lea.vmem %s5, %s735
        %p737 = pneg %p196
        %p738 = pneg %p193
        %p739 = scmp.lt.s32.totalorder %s38, 1
        %s740 = scalar_select %p739, %s38, 1
        %s741 = scalar_lea.vmem %s6, %s740
        %p742 = pneg %p222
        %p743 = pneg %p219
        %s744 = sand.u32 %s33, 1
        %s745 = scalar_lea.sflag [#allocation7], %s744
        %s746 = sand.u32 %s235, 1
        %s747 = smul.addr %s746, 16
        %s748 = scalar_lea.vmem [#allocation6], %s747
        %p749 = pneg %p248
        %p750 = pneg %p245
        %p751 = scmp.lt.s32.totalorder %s38, 1
        %s752 = scalar_select %p751, %s38, 1
        %s753 = scalar_lea.vmem %s8, %s752
        %p754 = pneg %p274
        %p755 = pneg %p271
        %p756 = scmp.lt.s32.totalorder %s38, 1
        %s757 = scalar_select %p756, %s38, 1
        %s758 = scalar_lea.vmem %s9, %s757
        %p759 = pneg %p300
        %p760 = pneg %p297
        %p761 = scmp.lt.s32.totalorder %s38, 1
        %s762 = scalar_select %p761, %s38, 1
        %s763 = scalar_lea.vmem %s10, %s762
        %p764 = pneg %p326
        %p765 = pneg %p323
        %s766 = sand.u32 %s33, 1
        %s767 = scalar_lea.sflag [#allocation7], %s766
        %s768 = sand.u32 %s339, 1
        %s769 = smul.addr %s768, 16
        %s770 = scalar_lea.vmem [#allocation8], %s769
        %p771 = pneg %p352
        %p772 = pneg %p349
        %p773 = scmp.lt.s32.totalorder %s38, 1
        %s774 = scalar_select %p773, %s38, 1
        %s775 = scalar_lea.vmem %s12, %s774
        %p776 = pneg %p378
        %p777 = pneg %p375
        %p778 = scmp.lt.s32.totalorder %s38, 1
        %s779 = scalar_select %p778, %s38, 1
        %s780 = smul.addr %s779, 8
        %s781 = smul.addr %s780, 4
        %s782 = scalar_lea.vmem %s13, %s781
        %p783 = pneg %p404
        %p784 = pneg %p401
        %p785 = scmp.lt.s32.totalorder %s38, 1
        %s786 = scalar_select %p785, %s38, 1
        %s787 = scalar_lea.vmem %s14, %s786
        %p788 = pneg %p430
        %p789 = pneg %p427
        %p790 = scmp.lt.s32.totalorder %s38, 1
        %s791 = scalar_select %p790, %s38, 1
        %s792 = scalar_lea.vmem %s15, %s791
        %p793 = pneg %p456
        %p794 = pneg %p453
        %p795 = scmp.lt.s32.totalorder %s38, 1
        %s796 = scalar_select %p795, %s38, 1
        %s797 = scalar_lea.vmem %s16, %s796
        %p798 = pneg %p482
        %p799 = pneg %p479
        %p800 = pneg %p508
        %p801 = pneg %p505
        %s802 = smul.u32 2, %s37
        %p803 = scmp.lt.s32.totalorder %s38, 1
        %s804 = scalar_select %p803, %s38, 1
        %s805 = smul.addr %s804, 4
        %s806 = smul.addr %s805, 4
        %s807 = scalar_lea.vmem %s1, %s806
        %p808 = scmp.lt.s32.totalorder %s38, 1
        %s809 = scalar_select %p808, %s38, 1
        %s810 = scalar_lea.vmem %s2, %s809
        %p811 = scmp.lt.s32.totalorder %s38, 1
        %s812 = scalar_select %p811, %s38, 1
        %s813 = smul.addr %s812, 4
        %s814 = smul.addr %s813, 4
        %s815 = scalar_lea.vmem %s3, %s814
        %p816 = scmp.lt.s32.totalorder %s38, 1
        %s817 = scalar_select %p816, %s38, 1
        %s818 = scalar_lea.vmem %s4, %s817
        %p819 = scmp.lt.s32.totalorder %s38, 1
        %s820 = scalar_select %p819, %s38, 1
        %s821 = smul.addr %s820, 4
        %s822 = smul.addr %s821, 4
        %s823 = scalar_lea.vmem %s5, %s822
        %p824 = scmp.lt.s32.totalorder %s38, 1
        %s825 = scalar_select %p824, %s38, 1
        %s826 = scalar_lea.vmem %s6, %s825
        %p827 = scmp.lt.s32.totalorder %s38, 1
        %s828 = scalar_select %p827, %s38, 1
        %s829 = scalar_lea.vmem %s8, %s828
        %p830 = scmp.lt.s32.totalorder %s38, 1
        %s831 = scalar_select %p830, %s38, 1
        %s832 = scalar_lea.vmem %s9, %s831
        %p833 = scmp.lt.s32.totalorder %s38, 1
        %s834 = scalar_select %p833, %s38, 1
        %s835 = scalar_lea.vmem %s10, %s834
        %p836 = scmp.lt.s32.totalorder %s38, 1
        %s837 = scalar_select %p836, %s38, 1
        %s838 = scalar_lea.vmem %s12, %s837
        %p839 = scmp.lt.s32.totalorder %s38, 1
        %s840 = scalar_select %p839, %s38, 1
        %s841 = smul.addr %s840, 8
        %s842 = smul.addr %s841, 4
        %s843 = scalar_lea.vmem %s13, %s842
        %p844 = scmp.lt.s32.totalorder %s38, 1
        %s845 = scalar_select %p844, %s38, 1
        %s846 = scalar_lea.vmem %s14, %s845
        %p847 = scmp.lt.s32.totalorder %s38, 1
        %s848 = scalar_select %p847, %s38, 1
        %s849 = scalar_lea.vmem %s15, %s848
        %p850 = scmp.lt.s32.totalorder %s38, 1
        %s851 = scalar_select %p850, %s38, 1
        %s852 = scalar_lea.vmem %s16, %s851
        %s853 = smul.u32 2, %s37
        %p855 = scmp.eq.s32.totalorder %s38, 0
        // Predicated region
        $region101: #{tpu_custom_call.1} parent=87 // pred_check
          %p856 = pneg %p855
        $region102: #{tpu_custom_call.1} parent=87 // pred_check_branch
          %858 = sbr.rel (%p856) target = $region104
        $region103: #{tpu_custom_call.1} parent=87 // pred_region
          %v859 = vld [vmem:[#allocation3] sm:$0xff]
          %v860 = vld [vmem:[#allocation3 + $0x8] sm:$0xff]
          %vm861 = vcmask 261120
          %862 = vst.msk [vmem:[#allocation9] sm:$0xff] %vm861, %v859
          %863 = vst.msk [vmem:[#allocation9 + $0x8] sm:$0xff] %vm861, %v860
        $region104: #{tpu_custom_call.1} parent=87 // pred_fallthru
          _
        loop: start=0, step=1, limit=2
        $region105: #{tpu_custom_call.1} parent=87 // loop_pre_header
          _
        $region106: #{tpu_custom_call.1} parent=87 // loop_header
          %s865 = sphi 0, %s869
          %p866 = scmp.ge.s32.totalorder %s865, 2
        $region107: #{tpu_custom_call.1} parent=87 // loop_header_branch
          %868 = sbr.rel (%p866) target = $region111
        $region108: #{tpu_custom_call.1} parent=87 // loop_body
          %s870 = smul.u32 %s865, 8
          %s871 = scalar_lea.vmem [#allocation9], %s870
          %v872 = vld [vmem:[%s871] sm:$0xff]
          %v873 = vpack.c.bf16 %v872, %v872
          %v874 = vld [vmem:[%s807] sm:$0xf]
          %v875 = vld [vmem:[%s807 + $0x4] sm:$0xf]
          %v876 = vld [vmem:[%s807 + $0x8] sm:$0xf]
          %v877 = vld [vmem:[%s807 + $0xc] sm:$0xf]
          %v878 = vld [vmem:[%s810] sm:$0x1]
          %v880 = vlaneseq
          %v881 = vshrl.u32 %v880, 7
          %v882 = vsub.s32 0, %v881
          %v883 = vrot.slane %v878, %v882
          %v889 = vunpack.c.l.b16 %v874
          %v890 = vunpack.c.l.b16 %v875
          %v891 = vunpack.c.l.b16 %v876
          %v892 = vunpack.c.l.b16 %v877
          %v893 = vpack.c.b16 %v890, %v889
          %v894 = vpack.c.b16 %v892, %v891
          %vm897 = vcmask 261120
          %v899 = vsel %vm897, %v873, 0
          %901 = vmatprep.subr.bf16.mxu0 0
          %902 = vmatpush1.bf16.msra.mxu0 0
          %903 = vmatprep.subr.bf16.mxu0 0
          %904 = vmatpush1.bf16.msra.mxu0 0
          %905 = vmatprep.subr.bf16.mxu0 0
          %906 = vmatpush1.bf16.msra.mxu0 0
          %907 = vmatprep.subr.bf16.mxu0 0
          %908 = vmatpush1.bf16.msra.mxu0 0
          %909 = vmatprep.subr.bf16.mxu0 0
          %910 = vmatpush1.bf16.msra.mxu0 0
          %911 = vmatprep.subr.bf16.mxu0 0
          %912 = vmatpush1.bf16.msra.mxu0 0
          %913 = vmatprep.subr.bf16.mxu0 0
          %914 = vmatpush1.bf16.msra.mxu0 %v894
          %915 = vmatprep.subr.bf16.mxu0 0
          %916 = vmatpush1.bf16.msra.mxu0 %v893
          %917 = vmatprep.subr.bf16.mxu0 0
          %918 = vmatpush2.bf16.msra.mxu0 0
          %919 = vmatprep.subr.bf16.mxu0 0
          %920 = vmatpush2.bf16.msra.mxu0 0
          %921 = vmatprep.subr.bf16.mxu0 0
          %922 = vmatpush2.bf16.msra.mxu0 0
          %923 = vmatprep.subr.bf16.mxu0 0
          %924 = vmatpush2.bf16.msra.mxu0 0
          %925 = vmatprep.subr.bf16.mxu0 0
          %926 = vmatpush2.bf16.msra.mxu0 0
          %927 = vmatprep.subr.bf16.mxu0 0
          %928 = vmatpush2.bf16.msra.mxu0 0
          %929 = vmatprep.subr.bf16.mxu0 0
          %930 = vmatpush2.bf16.msra.mxu0 0
          %931 = vmatprep.subr.bf16.mxu0 0
          %932 = vmatpush2.bf16.msra.mxu0 0
          %933 = vmatprep.mubr.bf16.mxu0 0
          %934 = vmatmul.mubr.bf16.gmra.mxu0 %v899
          %v935 = vpop.f32.mrf.mxu0
          %v936 = vadd.f32 %v883, %v935
          %v937 = vpop.f32.mrf.mxu0
          %v938 = vpop.f32.mrf.mxu0
          %v939 = vpop.f32.mrf.mxu0
          %940 = vdwg.mxu0
          %v941 = vld [vmem:[%s815] sm:$0xf]
          %v942 = vld [vmem:[%s815 + $0x4] sm:$0xf]
          %v943 = vld [vmem:[%s815 + $0x8] sm:$0xf]
          %v944 = vld [vmem:[%s815 + $0xc] sm:$0xf]
          %v945 = vld [vmem:[%s818] sm:$0x1]
          %v947 = vlaneseq
          %v948 = vshrl.u32 %v947, 7
          %v949 = vsub.s32 0, %v948
          %v950 = vrot.slane %v945, %v949
          %v956 = vunpack.c.l.b16 %v941
          %v957 = vunpack.c.l.b16 %v942
          %v958 = vunpack.c.l.b16 %v943
          %v959 = vunpack.c.l.b16 %v944
          %v960 = vpack.c.b16 %v957, %v956
          %v961 = vpack.c.b16 %v959, %v958
          %964 = vmatprep.subr.bf16.mxu0 0
          %965 = vmatpush1.bf16.msra.mxu0 0
          %966 = vmatprep.subr.bf16.mxu0 0
          %967 = vmatpush1.bf16.msra.mxu0 0
          %968 = vmatprep.subr.bf16.mxu0 0
          %969 = vmatpush1.bf16.msra.mxu0 0
          %970 = vmatprep.subr.bf16.mxu0 0
          %971 = vmatpush1.bf16.msra.mxu0 0
          %972 = vmatprep.subr.bf16.mxu0 0
          %973 = vmatpush1.bf16.msra.mxu0 0
          %974 = vmatprep.subr.bf16.mxu0 0
          %975 = vmatpush1.bf16.msra.mxu0 0
          %976 = vmatprep.subr.bf16.mxu0 0
          %977 = vmatpush1.bf16.msra.mxu0 %v961
          %978 = vmatprep.subr.bf16.mxu0 0
          %979 = vmatpush1.bf16.msra.mxu0 %v960
          %980 = vmatprep.subr.bf16.mxu0 0
          %981 = vmatpush2.bf16.msra.mxu0 0
          %982 = vmatprep.subr.bf16.mxu0 0
          %983 = vmatpush2.bf16.msra.mxu0 0
          %984 = vmatprep.subr.bf16.mxu0 0
          %985 = vmatpush2.bf16.msra.mxu0 0
          %986 = vmatprep.subr.bf16.mxu0 0
          %987 = vmatpush2.bf16.msra.mxu0 0
          %988 = vmatprep.subr.bf16.mxu0 0
          %989 = vmatpush2.bf16.msra.mxu0 0
          %990 = vmatprep.subr.bf16.mxu0 0
          %991 = vmatpush2.bf16.msra.mxu0 0
          %992 = vmatprep.subr.bf16.mxu0 0
          %993 = vmatpush2.bf16.msra.mxu0 0
          %994 = vmatprep.subr.bf16.mxu0 0
          %995 = vmatpush2.bf16.msra.mxu0 0
          %996 = vmatprep.mubr.bf16.mxu0 0
          %997 = vmatmul.mubr.bf16.gmra.mxu0 %v899
          %v998 = vpop.f32.mrf.mxu0
          %v999 = vadd.f32 %v950, %v998
          %v1000 = vpop.f32.mrf.mxu0
          %v1001 = vpop.f32.mrf.mxu0
          %v1002 = vpop.f32.mrf.mxu0
          %1003 = vdwg.mxu0
          %v1004 = vld [vmem:[%s823] sm:$0xf]
          %v1005 = vld [vmem:[%s823 + $0x4] sm:$0xf]
          %v1006 = vld [vmem:[%s823 + $0x8] sm:$0xf]
          %v1007 = vld [vmem:[%s823 + $0xc] sm:$0xf]
          %v1008 = vld [vmem:[%s826] sm:$0x1]
          %v1010 = vlaneseq
          %v1011 = vshrl.u32 %v1010, 7
          %v1012 = vsub.s32 0, %v1011
          %v1013 = vrot.slane %v1008, %v1012
          %v1019 = vunpack.c.l.b16 %v1004
          %v1020 = vunpack.c.l.b16 %v1005
          %v1021 = vunpack.c.l.b16 %v1006
          %v1022 = vunpack.c.l.b16 %v1007
          %v1023 = vpack.c.b16 %v1020, %v1019
          %v1024 = vpack.c.b16 %v1022, %v1021
          %1027 = vmatprep.subr.bf16.mxu0 0
          %1028 = vmatpush1.bf16.msra.mxu0 0
          %1029 = vmatprep.subr.bf16.mxu0 0
          %1030 = vmatpush1.bf16.msra.mxu0 0
          %1031 = vmatprep.subr.bf16.mxu0 0
          %1032 = vmatpush1.bf16.msra.mxu0 0
          %1033 = vmatprep.subr.bf16.mxu0 0
          %1034 = vmatpush1.bf16.msra.mxu0 0
          %1035 = vmatprep.subr.bf16.mxu0 0
          %1036 = vmatpush1.bf16.msra.mxu0 0
          %1037 = vmatprep.subr.bf16.mxu0 0
          %1038 = vmatpush1.bf16.msra.mxu0 0
          %1039 = vmatprep.subr.bf16.mxu0 0
          %1040 = vmatpush1.bf16.msra.mxu0 %v1024
          %1041 = vmatprep.subr.bf16.mxu0 0
          %1042 = vmatpush1.bf16.msra.mxu0 %v1023
          %1043 = vmatprep.subr.bf16.mxu0 0
          %1044 = vmatpush2.bf16.msra.mxu0 0
          %1045 = vmatprep.subr.bf16.mxu0 0
          %1046 = vmatpush2.bf16.msra.mxu0 0
          %1047 = vmatprep.subr.bf16.mxu0 0
          %1048 = vmatpush2.bf16.msra.mxu0 0
          %1049 = vmatprep.subr.bf16.mxu0 0
          %1050 = vmatpush2.bf16.msra.mxu0 0
          %1051 = vmatprep.subr.bf16.mxu0 0
          %1052 = vmatpush2.bf16.msra.mxu0 0
          %1053 = vmatprep.subr.bf16.mxu0 0
          %1054 = vmatpush2.bf16.msra.mxu0 0
          %1055 = vmatprep.subr.bf16.mxu0 0
          %1056 = vmatpush2.bf16.msra.mxu0 0
          %1057 = vmatprep.subr.bf16.mxu0 0
          %1058 = vmatpush2.bf16.msra.mxu0 0
          %1059 = vmatprep.mubr.bf16.mxu0 0
          %1060 = vmatmul.mubr.bf16.gmra.mxu0 %v899
          %v1061 = vpop.f32.mrf.mxu0
          %v1062 = vadd.f32 %v1013, %v1061
          %v1063 = vpop.f32.mrf.mxu0
          %v1064 = vpop.f32.mrf.mxu0
          %v1065 = vpop.f32.mrf.mxu0
          %1066 = vdwg.mxu0
          %v1067 = vpack.c.bf16 %v936, %v936
          %v1068 = vpack.c.bf16 %v999, %v999
          %v1069 = vpack.c.bf16 %v1062, %v1062
          %vm1070 = vcmask 64512
          %v1072 = vsel %vm1070, %v1067, 0
          %v1075 = vsel %vm1070, %v1068, 0
          %1077 = vmatprep.subr.bf16.mxu0 0
          %1078 = vmatpush1.bf16.xpose.msra.mxu0 0
          %1079 = vmatprep.subr.bf16.mxu0 0
          %1080 = vmatpush1.bf16.xpose.msra.mxu0 0
          %1081 = vmatprep.subr.bf16.mxu0 0
          %1082 = vmatpush1.bf16.xpose.msra.mxu0 0
          %1083 = vmatprep.subr.bf16.mxu0 0
          %1084 = vmatpush1.bf16.xpose.msra.mxu0 0
          %1085 = vmatprep.subr.bf16.mxu0 0
          %1086 = vmatpush1.bf16.xpose.msra.mxu0 0
          %1087 = vmatprep.subr.bf16.mxu0 0
          %1088 = vmatpush1.bf16.xpose.msra.mxu0 0
          %1089 = vmatprep.subr.bf16.mxu0 0
          %1090 = vmatpush1.bf16.xpose.msra.mxu0 0
          %1091 = vmatprep.subr.bf16.mxu0 0
          %1092 = vmatpush1.bf16.xpose.msra.mxu0 %v1075
          %1093 = vmatprep.subr.bf16.mxu0 0
          %1094 = vmatpush2.bf16.xpose.msra.mxu0 0
          %1095 = vmatprep.subr.bf16.mxu0 0
          %1096 = vmatpush2.bf16.xpose.msra.mxu0 0
          %1097 = vmatprep.subr.bf16.mxu0 0
          %1098 = vmatpush2.bf16.xpose.msra.mxu0 0
          %1099 = vmatprep.subr.bf16.mxu0 0
          %1100 = vmatpush2.bf16.xpose.msra.mxu0 0
          %1101 = vmatprep.subr.bf16.mxu0 0
          %1102 = vmatpush2.bf16.xpose.msra.mxu0 0
          %1103 = vmatprep.subr.bf16.mxu0 0
          %1104 = vmatpush2.bf16.xpose.msra.mxu0 0
          %1105 = vmatprep.subr.bf16.mxu0 0
          %1106 = vmatpush2.bf16.xpose.msra.mxu0 0
          %1107 = vmatprep.subr.bf16.mxu0 0
          %1108 = vmatpush2.bf16.xpose.msra.mxu0 0
          %1109 = vmatprep.mubr.bf16.mxu0 0
          %1110 = vmatmul.mubr.bf16.gmra.mxu0 %v1072
          %v1111 = vpop.f32.mrf.mxu0
          %v1112 = vadd.f32 0.0, %v1111
          %v1113 = vpop.f32.mrf.mxu0
          %v1114 = vpop.f32.mrf.mxu0
          %v1115 = vpop.f32.mrf.mxu0
          %1116 = vdwg.mxu0
          %v1117 = vsel %vm1070, %v1112, -inf
          %1118 = vmax.xlane.f32.xlu0 %v1117
          %v1119 = vpop.xlane.xlu0 %1118
          %v1120 = vsub.f32 %v1112, %v1119
          %v1121 = vmul.f32 %v1120, 1.442695
          %v1122 = vpow.pop %v1121
          %v1123 = vsel %vm1070, %v1122, 0.0
          %1124 = vadd.xlane.f32.xlu0 %v1123
          %v1125 = vpop.xlane.xlu0 %1124
          %v1126 = vrcp.pop %v1125
          %v1127 = vmul.f32 %v1122, %v1126
          %v1128 = vpack.c.bf16 %v1127, %v1127
          %v1130 = vsel %vm1070, %v1128, 0
          %vm1132 = vcmask 1043456
          %v1134 = vsel %vm1132, %v1069, 0
          %1136 = vmatprep.subr.bf16.mxu0 0
          %1137 = vmatpush1.bf16.msra.mxu0 0
          %1138 = vmatprep.subr.bf16.mxu0 0
          %1139 = vmatpush1.bf16.msra.mxu0 0
          %1140 = vmatprep.subr.bf16.mxu0 0
          %1141 = vmatpush1.bf16.msra.mxu0 0
          %1142 = vmatprep.subr.bf16.mxu0 0
          %1143 = vmatpush1.bf16.msra.mxu0 0
          %1144 = vmatprep.subr.bf16.mxu0 0
          %1145 = vmatpush1.bf16.msra.mxu0 0
          %1146 = vmatprep.subr.bf16.mxu0 0
          %1147 = vmatpush1.bf16.msra.mxu0 0
          %1148 = vmatprep.subr.bf16.mxu0 0
          %1149 = vmatpush1.bf16.msra.mxu0 0
          %1150 = vmatprep.subr.bf16.mxu0 0
          %1151 = vmatpush1.bf16.msra.mxu0 %v1134
          %1152 = vmatprep.subr.bf16.mxu0 0
          %1153 = vmatpush2.bf16.msra.mxu0 0
          %1154 = vmatprep.subr.bf16.mxu0 0
          %1155 = vmatpush2.bf16.msra.mxu0 0
          %1156 = vmatprep.subr.bf16.mxu0 0
          %1157 = vmatpush2.bf16.msra.mxu0 0
          %1158 = vmatprep.subr.bf16.mxu0 0
          %1159 = vmatpush2.bf16.msra.mxu0 0
          %1160 = vmatprep.subr.bf16.mxu0 0
          %1161 = vmatpush2.bf16.msra.mxu0 0
          %1162 = vmatprep.subr.bf16.mxu0 0
          %1163 = vmatpush2.bf16.msra.mxu0 0
          %1164 = vmatprep.subr.bf16.mxu0 0
          %1165 = vmatpush2.bf16.msra.mxu0 0
          %1166 = vmatprep.subr.bf16.mxu0 0
          %1167 = vmatpush2.bf16.msra.mxu0 0
          %1168 = vmatprep.mubr.bf16.mxu0 0
          %1169 = vmatmul.mubr.bf16.gmra.mxu0 %v1130
          %v1170 = vpop.f32.mrf.mxu0
          %v1171 = vadd.f32 0.0, %v1170
          %v1172 = vpop.f32.mrf.mxu0
          %v1173 = vpop.f32.mrf.mxu0
          %v1174 = vpop.f32.mrf.mxu0
          %1175 = vdwg.mxu0
          %1176 = vst.msk [vmem:[#allocation2] sm:$0xff] %vm1070, %v1171
          %1178 = vrot.lane.b32.xlu0 %v1067, 120
          %v1179 = vpop.permute.xlu0 %1178
          %1181 = vrot.lane.b32.xlu0 %v1068, 120
          %v1182 = vpop.permute.xlu0 %1181
          %v1184 = vsel %vm1070, %v1179, 0
          %v1187 = vsel %vm1070, %v1182, 0
          %1189 = vmatprep.subr.bf16.mxu0 0
          %1190 = vmatpush1.bf16.xpose.msra.mxu0 0
          %1191 = vmatprep.subr.bf16.mxu0 0
          %1192 = vmatpush1.bf16.xpose.msra.mxu0 0
          %1193 = vmatprep.subr.bf16.mxu0 0
          %1194 = vmatpush1.bf16.xpose.msra.mxu0 0
          %1195 = vmatprep.subr.bf16.mxu0 0
          %1196 = vmatpush1.bf16.xpose.msra.mxu0 0
          %1197 = vmatprep.subr.bf16.mxu0 0
          %1198 = vmatpush1.bf16.xpose.msra.mxu0 0
          %1199 = vmatprep.subr.bf16.mxu0 0
          %1200 = vmatpush1.bf16.xpose.msra.mxu0 0
          %1201 = vmatprep.subr.bf16.mxu0 0
          %1202 = vmatpush1.bf16.xpose.msra.mxu0 0
          %1203 = vmatprep.subr.bf16.mxu0 0
          %1204 = vmatpush1.bf16.xpose.msra.mxu0 %v1187
          %1205 = vmatprep.subr.bf16.mxu0 0
          %1206 = vmatpush2.bf16.xpose.msra.mxu0 0
          %1207 = vmatprep.subr.bf16.mxu0 0
          %1208 = vmatpush2.bf16.xpose.msra.mxu0 0
          %1209 = vmatprep.subr.bf16.mxu0 0
          %1210 = vmatpush2.bf16.xpose.msra.mxu0 0
          %1211 = vmatprep.subr.bf16.mxu0 0
          %1212 = vmatpush2.bf16.xpose.msra.mxu0 0
          %1213 = vmatprep.subr.bf16.mxu0 0
          %1214 = vmatpush2.bf16.xpose.msra.mxu0 0
          %1215 = vmatprep.subr.bf16.mxu0 0
          %1216 = vmatpush2.bf16.xpose.msra.mxu0 0
          %1217 = vmatprep.subr.bf16.mxu0 0
          %1218 = vmatpush2.bf16.xpose.msra.mxu0 0
          %1219 = vmatprep.subr.bf16.mxu0 0
          %1220 = vmatpush2.bf16.xpose.msra.mxu0 0
          %1221 = vmatprep.mubr.bf16.mxu0 0
          %1222 = vmatmul.mubr.bf16.gmra.mxu0 %v1184
          %v1223 = vpop.f32.mrf.mxu0
          %v1224 = vadd.f32 0.0, %v1223
          %v1225 = vpop.f32.mrf.mxu0
          %v1226 = vpop.f32.mrf.mxu0
          %v1227 = vpop.f32.mrf.mxu0
          %1228 = vdwg.mxu0
          %v1229 = vsel %vm1070, %v1224, -inf
          %1230 = vmax.xlane.f32.xlu0 %v1229
          %v1231 = vpop.xlane.xlu0 %1230
          %v1232 = vsub.f32 %v1224, %v1231
          %v1233 = vmul.f32 %v1232, 1.442695
          %v1234 = vpow.pop %v1233
          %v1235 = vsel %vm1070, %v1234, 0.0
          %1236 = vadd.xlane.f32.xlu0 %v1235
          %v1237 = vpop.xlane.xlu0 %1236
          %v1238 = vrcp.pop %v1237
          %v1239 = vmul.f32 %v1234, %v1238
          %v1240 = vpack.c.bf16 %v1239, %v1239
          %1242 = vrot.lane.b32.xlu0 %v1069, 120
          %v1243 = vpop.permute.xlu0 %1242
          %v1245 = vsel %vm1070, %v1240, 0
          %v1248 = vsel %vm1132, %v1243, 0
          %1250 = vmatprep.subr.bf16.mxu0 0
          %1251 = vmatpush1.bf16.msra.mxu0 0
          %1252 = vmatprep.subr.bf16.mxu0 0
          %1253 = vmatpush1.bf16.msra.mxu0 0
          %1254 = vmatprep.subr.bf16.mxu0 0
          %1255 = vmatpush1.bf16.msra.mxu0 0
          %1256 = vmatprep.subr.bf16.mxu0 0
          %1257 = vmatpush1.bf16.msra.mxu0 0
          %1258 = vmatprep.subr.bf16.mxu0 0
          %1259 = vmatpush1.bf16.msra.mxu0 0
          %1260 = vmatprep.subr.bf16.mxu0 0
          %1261 = vmatpush1.bf16.msra.mxu0 0
          %1262 = vmatprep.subr.bf16.mxu0 0
          %1263 = vmatpush1.bf16.msra.mxu0 0
          %1264 = vmatprep.subr.bf16.mxu0 0
          %1265 = vmatpush1.bf16.msra.mxu0 %v1248
          %1266 = vmatprep.subr.bf16.mxu0 0
          %1267 = vmatpush2.bf16.msra.mxu0 0
          %1268 = vmatprep.subr.bf16.mxu0 0
          %1269 = vmatpush2.bf16.msra.mxu0 0
          %1270 = vmatprep.subr.bf16.mxu0 0
          %1271 = vmatpush2.bf16.msra.mxu0 0
          %1272 = vmatprep.subr.bf16.mxu0 0
          %1273 = vmatpush2.bf16.msra.mxu0 0
          %1274 = vmatprep.subr.bf16.mxu0 0
          %1275 = vmatpush2.bf16.msra.mxu0 0
          %1276 = vmatprep.subr.bf16.mxu0 0
          %1277 = vmatpush2.bf16.msra.mxu0 0
          %1278 = vmatprep.subr.bf16.mxu0 0
          %1279 = vmatpush2.bf16.msra.mxu0 0
          %1280 = vmatprep.subr.bf16.mxu0 0
          %1281 = vmatpush2.bf16.msra.mxu0 0
          %1282 = vmatprep.mubr.bf16.mxu0 0
          %1283 = vmatmul.mubr.bf16.gmra.mxu0 %v1245
          %v1284 = vpop.f32.mrf.mxu0
          %v1285 = vadd.f32 0.0, %v1284
          %v1286 = vpop.f32.mrf.mxu0
          %v1287 = vpop.f32.mrf.mxu0
          %v1288 = vpop.f32.mrf.mxu0
          %1289 = vdwg.mxu0
          %1291 = vrot.lane.b32.xlu0 %v1285, 8
          %v1292 = vpop.permute.xlu0 %1291
          %vm1294 = vcmask 130112
          %1295 = vst.msk [vmem:[#allocation2] sm:$0xff] %vm1294, %v1292
          %1296 = vrot.lane.b32.xlu0 %v1067, 112
          %v1297 = vpop.permute.xlu0 %1296
          %1298 = vrot.lane.b32.xlu0 %v1068, 112
          %v1299 = vpop.permute.xlu0 %1298
          %v1301 = vsel %vm1070, %v1297, 0
          %v1304 = vsel %vm1070, %v1299, 0
          %1306 = vmatprep.subr.bf16.mxu0 0
          %1307 = vmatpush1.bf16.xpose.msra.mxu0 0
          %1308 = vmatprep.subr.bf16.mxu0 0
          %1309 = vmatpush1.bf16.xpose.msra.mxu0 0
          %1310 = vmatprep.subr.bf16.mxu0 0
          %1311 = vmatpush1.bf16.xpose.msra.mxu0 0
          %1312 = vmatprep.subr.bf16.mxu0 0
          %1313 = vmatpush1.bf16.xpose.msra.mxu0 0
          %1314 = vmatprep.subr.bf16.mxu0 0
          %1315 = vmatpush1.bf16.xpose.msra.mxu0 0
          %1316 = vmatprep.subr.bf16.mxu0 0
          %1317 = vmatpush1.bf16.xpose.msra.mxu0 0
          %1318 = vmatprep.subr.bf16.mxu0 0
          %1319 = vmatpush1.bf16.xpose.msra.mxu0 0
          %1320 = vmatprep.subr.bf16.mxu0 0
          %1321 = vmatpush1.bf16.xpose.msra.mxu0 %v1304
          %1322 = vmatprep.subr.bf16.mxu0 0
          %1323 = vmatpush2.bf16.xpose.msra.mxu0 0
          %1324 = vmatprep.subr.bf16.mxu0 0
          %1325 = vmatpush2.bf16.xpose.msra.mxu0 0
          %1326 = vmatprep.subr.bf16.mxu0 0
          %1327 = vmatpush2.bf16.xpose.msra.mxu0 0
          %1328 = vmatprep.subr.bf16.mxu0 0
          %1329 = vmatpush2.bf16.xpose.msra.mxu0 0
          %1330 = vmatprep.subr.bf16.mxu0 0
          %1331 = vmatpush2.bf16.xpose.msra.mxu0 0
          %1332 = vmatprep.subr.bf16.mxu0 0
          %1333 = vmatpush2.bf16.xpose.msra.mxu0 0
          %1334 = vmatprep.subr.bf16.mxu0 0
          %1335 = vmatpush2.bf16.xpose.msra.mxu0 0
          %1336 = vmatprep.subr.bf16.mxu0 0
          %1337 = vmatpush2.bf16.xpose.msra.mxu0 0
          %1338 = vmatprep.mubr.bf16.mxu0 0
          %1339 = vmatmul.mubr.bf16.gmra.mxu0 %v1301
          %v1340 = vpop.f32.mrf.mxu0
          %v1341 = vadd.f32 0.0, %v1340
          %v1342 = vpop.f32.mrf.mxu0
          %v1343 = vpop.f32.mrf.mxu0
          %v1344 = vpop.f32.mrf.mxu0
          %1345 = vdwg.mxu0
          %v1346 = vsel %vm1070, %v1341, -inf
          %1347 = vmax.xlane.f32.xlu0 %v1346
          %v1348 = vpop.xlane.xlu0 %1347
          %v1349 = vsub.f32 %v1341, %v1348
          %v1350 = vmul.f32 %v1349, 1.442695
          %v1351 = vpow.pop %v1350
          %v1352 = vsel %vm1070, %v1351, 0.0
          %1353 = vadd.xlane.f32.xlu0 %v1352
          %v1354 = vpop.xlane.xlu0 %1353
          %v1355 = vrcp.pop %v1354
          %v1356 = vmul.f32 %v1351, %v1355
          %v1357 = vpack.c.bf16 %v1356, %v1356
          %1358 = vrot.lane.b32.xlu0 %v1069, 112
          %v1359 = vpop.permute.xlu0 %1358
          %v1361 = vsel %vm1070, %v1357, 0
          %v1364 = vsel %vm1132, %v1359, 0
          %1366 = vmatprep.subr.bf16.mxu0 0
          %1367 = vmatpush1.bf16.msra.mxu0 0
          %1368 = vmatprep.subr.bf16.mxu0 0
          %1369 = vmatpush1.bf16.msra.mxu0 0
          %1370 = vmatprep.subr.bf16.mxu0 0
          %1371 = vmatpush1.bf16.msra.mxu0 0
          %1372 = vmatprep.subr.bf16.mxu0 0
          %1373 = vmatpush1.bf16.msra.mxu0 0
          %1374 = vmatprep.subr.bf16.mxu0 0
          %1375 = vmatpush1.bf16.msra.mxu0 0
          %1376 = vmatprep.subr.bf16.mxu0 0
          %1377 = vmatpush1.bf16.msra.mxu0 0
          %1378 = vmatprep.subr.bf16.mxu0 0
          %1379 = vmatpush1.bf16.msra.mxu0 0
          %1380 = vmatprep.subr.bf16.mxu0 0
          %1381 = vmatpush1.bf16.msra.mxu0 %v1364
          %1382 = vmatprep.subr.bf16.mxu0 0
          %1383 = vmatpush2.bf16.msra.mxu0 0
          %1384 = vmatprep.subr.bf16.mxu0 0
          %1385 = vmatpush2.bf16.msra.mxu0 0
          %1386 = vmatprep.subr.bf16.mxu0 0
          %1387 = vmatpush2.bf16.msra.mxu0 0
          %1388 = vmatprep.subr.bf16.mxu0 0
          %1389 = vmatpush2.bf16.msra.mxu0 0
          %1390 = vmatprep.subr.bf16.mxu0 0
          %1391 = vmatpush2.bf16.msra.mxu0 0
          %1392 = vmatprep.subr.bf16.mxu0 0
          %1393 = vmatpush2.bf16.msra.mxu0 0
          %1394 = vmatprep.subr.bf16.mxu0 0
          %1395 = vmatpush2.bf16.msra.mxu0 0
          %1396 = vmatprep.subr.bf16.mxu0 0
          %1397 = vmatpush2.bf16.msra.mxu0 0
          %1398 = vmatprep.mubr.bf16.mxu0 0
          %1399 = vmatmul.mubr.bf16.gmra.mxu0 %v1361
          %v1400 = vpop.f32.mrf.mxu0
          %v1401 = vadd.f32 0.0, %v1400
          %v1402 = vpop.f32.mrf.mxu0
          %v1403 = vpop.f32.mrf.mxu0
          %v1404 = vpop.f32.mrf.mxu0
          %1405 = vdwg.mxu0
          %1407 = vrot.lane.b32.xlu0 %v1401, 16
          %v1408 = vpop.permute.xlu0 %1407
          %vm1410 = vcmask 195712
          %1411 = vst.msk [vmem:[#allocation2] sm:$0xff] %vm1410, %v1408
          %1412 = vrot.lane.b32.xlu0 %v1067, 104
          %v1413 = vpop.permute.xlu0 %1412
          %1414 = vrot.lane.b32.xlu0 %v1068, 104
          %v1415 = vpop.permute.xlu0 %1414
          %v1417 = vsel %vm1070, %v1413, 0
          %v1420 = vsel %vm1070, %v1415, 0
          %1422 = vmatprep.subr.bf16.mxu0 0
          %1423 = vmatpush1.bf16.xpose.msra.mxu0 0
          %1424 = vmatprep.subr.bf16.mxu0 0
          %1425 = vmatpush1.bf16.xpose.msra.mxu0 0
          %1426 = vmatprep.subr.bf16.mxu0 0
          %1427 = vmatpush1.bf16.xpose.msra.mxu0 0
          %1428 = vmatprep.subr.bf16.mxu0 0
          %1429 = vmatpush1.bf16.xpose.msra.mxu0 0
          %1430 = vmatprep.subr.bf16.mxu0 0
          %1431 = vmatpush1.bf16.xpose.msra.mxu0 0
          %1432 = vmatprep.subr.bf16.mxu0 0
          %1433 = vmatpush1.bf16.xpose.msra.mxu0 0
          %1434 = vmatprep.subr.bf16.mxu0 0
          %1435 = vmatpush1.bf16.xpose.msra.mxu0 0
          %1436 = vmatprep.subr.bf16.mxu0 0
          %1437 = vmatpush1.bf16.xpose.msra.mxu0 %v1420
          %1438 = vmatprep.subr.bf16.mxu0 0
          %1439 = vmatpush2.bf16.xpose.msra.mxu0 0
          %1440 = vmatprep.subr.bf16.mxu0 0
          %1441 = vmatpush2.bf16.xpose.msra.mxu0 0
          %1442 = vmatprep.subr.bf16.mxu0 0
          %1443 = vmatpush2.bf16.xpose.msra.mxu0 0
          %1444 = vmatprep.subr.bf16.mxu0 0
          %1445 = vmatpush2.bf16.xpose.msra.mxu0 0
          %1446 = vmatprep.subr.bf16.mxu0 0
          %1447 = vmatpush2.bf16.xpose.msra.mxu0 0
          %1448 = vmatprep.subr.bf16.mxu0 0
          %1449 = vmatpush2.bf16.xpose.msra.mxu0 0
          %1450 = vmatprep.subr.bf16.mxu0 0
          %1451 = vmatpush2.bf16.xpose.msra.mxu0 0
          %1452 = vmatprep.subr.bf16.mxu0 0
          %1453 = vmatpush2.bf16.xpose.msra.mxu0 0
          %1454 = vmatprep.mubr.bf16.mxu0 0
          %1455 = vmatmul.mubr.bf16.gmra.mxu0 %v1417
          %v1456 = vpop.f32.mrf.mxu0
          %v1457 = vadd.f32 0.0, %v1456
          %v1458 = vpop.f32.mrf.mxu0
          %v1459 = vpop.f32.mrf.mxu0
          %v1460 = vpop.f32.mrf.mxu0
          %1461 = vdwg.mxu0
          %v1462 = vsel %vm1070, %v1457, -inf
          %1463 = vmax.xlane.f32.xlu0 %v1462
          %v1464 = vpop.xlane.xlu0 %1463
          %v1465 = vsub.f32 %v1457, %v1464
          %v1466 = vmul.f32 %v1465, 1.442695
          %v1467 = vpow.pop %v1466
          %v1468 = vsel %vm1070, %v1467, 0.0
          %1469 = vadd.xlane.f32.xlu0 %v1468
          %v1470 = vpop.xlane.xlu0 %1469
          %v1471 = vrcp.pop %v1470
          %v1472 = vmul.f32 %v1467, %v1471
          %v1473 = vpack.c.bf16 %v1472, %v1472
          %1474 = vrot.lane.b32.xlu0 %v1069, 104
          %v1475 = vpop.permute.xlu0 %1474
          %v1477 = vsel %vm1070, %v1473, 0
          %v1480 = vsel %vm1132, %v1475, 0
          %1482 = vmatprep.subr.bf16.mxu0 0
          %1483 = vmatpush1.bf16.msra.mxu0 0
          %1484 = vmatprep.subr.bf16.mxu0 0
          %1485 = vmatpush1.bf16.msra.mxu0 0
          %1486 = vmatprep.subr.bf16.mxu0 0
          %1487 = vmatpush1.bf16.msra.mxu0 0
          %1488 = vmatprep.subr.bf16.mxu0 0
          %1489 = vmatpush1.bf16.msra.mxu0 0
          %1490 = vmatprep.subr.bf16.mxu0 0
          %1491 = vmatpush1.bf16.msra.mxu0 0
          %1492 = vmatprep.subr.bf16.mxu0 0
          %1493 = vmatpush1.bf16.msra.mxu0 0
          %1494 = vmatprep.subr.bf16.mxu0 0
          %1495 = vmatpush1.bf16.msra.mxu0 0
          %1496 = vmatprep.subr.bf16.mxu0 0
          %1497 = vmatpush1.bf16.msra.mxu0 %v1480
          %1498 = vmatprep.subr.bf16.mxu0 0
          %1499 = vmatpush2.bf16.msra.mxu0 0
          %1500 = vmatprep.subr.bf16.mxu0 0
          %1501 = vmatpush2.bf16.msra.mxu0 0
          %1502 = vmatprep.subr.bf16.mxu0 0
          %1503 = vmatpush2.bf16.msra.mxu0 0
          %1504 = vmatprep.subr.bf16.mxu0 0
          %1505 = vmatpush2.bf16.msra.mxu0 0
          %1506 = vmatprep.subr.bf16.mxu0 0
          %1507 = vmatpush2.bf16.msra.mxu0 0
          %1508 = vmatprep.subr.bf16.mxu0 0
          %1509 = vmatpush2.bf16.msra.mxu0 0
          %1510 = vmatprep.subr.bf16.mxu0 0
          %1511 = vmatpush2.bf16.msra.mxu0 0
          %1512 = vmatprep.subr.bf16.mxu0 0
          %1513 = vmatpush2.bf16.msra.mxu0 0
          %1514 = vmatprep.mubr.bf16.mxu0 0
          %1515 = vmatmul.mubr.bf16.gmra.mxu0 %v1477
          %v1516 = vpop.f32.mrf.mxu0
          %v1517 = vadd.f32 0.0, %v1516
          %v1518 = vpop.f32.mrf.mxu0
          %v1519 = vpop.f32.mrf.mxu0
          %v1520 = vpop.f32.mrf.mxu0
          %1521 = vdwg.mxu0
          %1523 = vrot.lane.b32.xlu0 %v1517, 24
          %v1524 = vpop.permute.xlu0 %1523
          %vm1526 = vcmask 261312
          %1527 = vst.msk [vmem:[#allocation2] sm:$0xff] %vm1526, %v1524
          %v1528 = vld [vmem:[#allocation2] sm:$0xff]
          %v1529 = vpack.c.bf16 %v1528, %v1528
          %v1530 = vld [vmem:[%s692] sm:$0xf]
          %v1531 = vld [vmem:[%s692 + $0x4] sm:$0xf]
          %v1532 = vld [vmem:[%s692 + $0x8] sm:$0xf]
          %v1533 = vld [vmem:[%s692 + $0xc] sm:$0xf]
          %v1534 = vld [vmem:[%s829] sm:$0x1]
          %v1536 = vlaneseq
          %v1537 = vshrl.u32 %v1536, 7
          %v1538 = vsub.s32 0, %v1537
          %v1539 = vrot.slane %v1534, %v1538
          %v1545 = vunpack.c.l.b16 %v1530
          %v1546 = vunpack.c.l.b16 %v1531
          %v1547 = vunpack.c.l.b16 %v1532
          %v1548 = vunpack.c.l.b16 %v1533
          %v1549 = vpack.c.b16 %v1546, %v1545
          %v1550 = vpack.c.b16 %v1548, %v1547
          %v1554 = vsel %vm897, %v1529, 0
          %1556 = vmatprep.subr.bf16.mxu0 0
          %1557 = vmatpush1.bf16.msra.mxu0 0
          %1558 = vmatprep.subr.bf16.mxu0 0
          %1559 = vmatpush1.bf16.msra.mxu0 0
          %1560 = vmatprep.subr.bf16.mxu0 0
          %1561 = vmatpush1.bf16.msra.mxu0 0
          %1562 = vmatprep.subr.bf16.mxu0 0
          %1563 = vmatpush1.bf16.msra.mxu0 0
          %1564 = vmatprep.subr.bf16.mxu0 0
          %1565 = vmatpush1.bf16.msra.mxu0 0
          %1566 = vmatprep.subr.bf16.mxu0 0
          %1567 = vmatpush1.bf16.msra.mxu0 0
          %1568 = vmatprep.subr.bf16.mxu0 0
          %1569 = vmatpush1.bf16.msra.mxu0 %v1550
          %1570 = vmatprep.subr.bf16.mxu0 0
          %1571 = vmatpush1.bf16.msra.mxu0 %v1549
          %1572 = vmatprep.subr.bf16.mxu0 0
          %1573 = vmatpush2.bf16.msra.mxu0 0
          %1574 = vmatprep.subr.bf16.mxu0 0
          %1575 = vmatpush2.bf16.msra.mxu0 0
          %1576 = vmatprep.subr.bf16.mxu0 0
          %1577 = vmatpush2.bf16.msra.mxu0 0
          %1578 = vmatprep.subr.bf16.mxu0 0
          %1579 = vmatpush2.bf16.msra.mxu0 0
          %1580 = vmatprep.subr.bf16.mxu0 0
          %1581 = vmatpush2.bf16.msra.mxu0 0
          %1582 = vmatprep.subr.bf16.mxu0 0
          %1583 = vmatpush2.bf16.msra.mxu0 0
          %1584 = vmatprep.subr.bf16.mxu0 0
          %1585 = vmatpush2.bf16.msra.mxu0 0
          %1586 = vmatprep.subr.bf16.mxu0 0
          %1587 = vmatpush2.bf16.msra.mxu0 0
          %1588 = vmatprep.mubr.bf16.mxu0 0
          %1589 = vmatmul.mubr.bf16.gmra.mxu0 %v1554
          %v1590 = vpop.f32.mrf.mxu0
          %v1591 = vadd.f32 %v1539, %v1590
          %v1592 = vpop.f32.mrf.mxu0
          %v1593 = vpop.f32.mrf.mxu0
          %v1594 = vpop.f32.mrf.mxu0
          %1595 = vdwg.mxu0
          %v1596 = vadd.f32 %v872, %v1591
          %v1597 = vsel %vm897, %v1596, 0.0
          %1598 = vadd.xlane.f32.xlu0 %v1597
          %v1599 = vpop.xlane.xlu0 %1598
          %v1600 = vrcp.pop 32.0
          %v1601 = vmul.f32 %v1599, %v1600
          %v1602 = vsub.f32 %v1596, %v1601
          %v1603 = vmul.f32 %v1602, %v1602
          %v1604 = vsel %vm897, %v1603, 0.0
          %1605 = vadd.xlane.f32.xlu0 %v1604
          %v1606 = vpop.xlane.xlu0 %1605
          %v1607 = vmul.f32 %v1606, %v1600
          %v1608 = vadd.f32 %v1607, 1e-12
          %v1609 = vrsqrt.pop %v1608
          %v1610 = vmul.f32 %v1602, %v1609
          %v1611 = vld [vmem:[%s832] sm:$0x1]
          %v1613 = vlaneseq
          %v1614 = vshrl.u32 %v1613, 7
          %v1615 = vsub.s32 0, %v1614
          %v1616 = vrot.slane %v1611, %v1615
          %v1618 = vmul.f32 %v1610, %v1616
          %v1619 = vld [vmem:[%s835] sm:$0x1]
          %v1621 = vlaneseq
          %v1622 = vshrl.u32 %v1621, 7
          %v1623 = vsub.s32 0, %v1622
          %v1624 = vrot.slane %v1619, %v1623
          %v1626 = vadd.f32 %v1618, %v1624
          %v1627 = vpack.c.bf16 %v1626, %v1626
          %v1628 = vld [vmem:[%s701] sm:$0xf]
          %v1629 = vld [vmem:[%s701 + $0x4] sm:$0xf]
          %v1630 = vld [vmem:[%s701 + $0x8] sm:$0xf]
          %v1631 = vld [vmem:[%s701 + $0xc] sm:$0xf]
          %v1632 = vld [vmem:[%s838] sm:$0x1]
          %v1634 = vlaneseq
          %v1635 = vshrl.u32 %v1634, 7
          %v1636 = vsub.s32 0, %v1635
          %v1637 = vrot.slane %v1632, %v1636
          %v1643 = vunpack.c.l.b16 %v1628
          %v1644 = vunpack.c.l.b16 %v1629
          %v1645 = vunpack.c.l.b16 %v1630
          %v1646 = vunpack.c.l.b16 %v1631
          %v1647 = vpack.c.b16 %v1644, %v1643
          %v1648 = vpack.c.b16 %v1646, %v1645
          %v1652 = vsel %vm897, %v1627, 0
          %1654 = vmatprep.subr.bf16.mxu0 0
          %1655 = vmatpush1.bf16.msra.mxu0 0
          %1656 = vmatprep.subr.bf16.mxu0 0
          %1657 = vmatpush1.bf16.msra.mxu0 0
          %1658 = vmatprep.subr.bf16.mxu0 0
          %1659 = vmatpush1.bf16.msra.mxu0 0
          %1660 = vmatprep.subr.bf16.mxu0 0
          %1661 = vmatpush1.bf16.msra.mxu0 0
          %1662 = vmatprep.subr.bf16.mxu0 0
          %1663 = vmatpush1.bf16.msra.mxu0 0
          %1664 = vmatprep.subr.bf16.mxu0 0
          %1665 = vmatpush1.bf16.msra.mxu0 0
          %1666 = vmatprep.subr.bf16.mxu0 0
          %1667 = vmatpush1.bf16.msra.mxu0 %v1648
          %1668 = vmatprep.subr.bf16.mxu0 0
          %1669 = vmatpush1.bf16.msra.mxu0 %v1647
          %1670 = vmatprep.subr.bf16.mxu0 0
          %1671 = vmatpush2.bf16.msra.mxu0 0
          %1672 = vmatprep.subr.bf16.mxu0 0
          %1673 = vmatpush2.bf16.msra.mxu0 0
          %1674 = vmatprep.subr.bf16.mxu0 0
          %1675 = vmatpush2.bf16.msra.mxu0 0
          %1676 = vmatprep.subr.bf16.mxu0 0
          %1677 = vmatpush2.bf16.msra.mxu0 0
          %1678 = vmatprep.subr.bf16.mxu0 0
          %1679 = vmatpush2.bf16.msra.mxu0 0
          %1680 = vmatprep.subr.bf16.mxu0 0
          %1681 = vmatpush2.bf16.msra.mxu0 0
          %1682 = vmatprep.subr.bf16.mxu0 0
          %1683 = vmatpush2.bf16.msra.mxu0 0
          %1684 = vmatprep.subr.bf16.mxu0 0
          %1685 = vmatpush2.bf16.msra.mxu0 0
          %1686 = vmatprep.mubr.bf16.mxu0 0
          %1687 = vmatmul.mubr.bf16.gmra.mxu0 %v1652
          %v1688 = vpop.f32.mrf.mxu0
          %v1689 = vadd.f32 %v1637, %v1688
          %v1690 = vpop.f32.mrf.mxu0
          %v1691 = vpop.f32.mrf.mxu0
          %v1692 = vpop.f32.mrf.mxu0
          %1693 = vdwg.mxu0
          %v1694 = vmax.f32 %v1689, 0.0
          %v1695 = vpack.c.bf16 %v1694, %v1694
          %v1696 = vld [vmem:[%s843] sm:$0xf]
          %v1697 = vld [vmem:[%s843 + $0x4] sm:$0xf]
          %v1698 = vld [vmem:[%s843 + $0x8] sm:$0xf]
          %v1699 = vld [vmem:[%s843 + $0xc] sm:$0xf]
          %v1700 = vld [vmem:[%s843 + $0x10] sm:$0xf]
          %v1701 = vld [vmem:[%s843 + $0x14] sm:$0xf]
          %v1702 = vld [vmem:[%s843 + $0x18] sm:$0xf]
          %v1703 = vld [vmem:[%s843 + $0x1c] sm:$0xf]
          %v1704 = vld [vmem:[%s846] sm:$0x1]
          %v1706 = vlaneseq
          %v1707 = vshrl.u32 %v1706, 7
          %v1708 = vsub.s32 0, %v1707
          %v1709 = vrot.slane %v1704, %v1708
          %v1719 = vunpack.c.l.b16 %v1696
          %v1720 = vunpack.c.l.b16 %v1697
          %v1721 = vunpack.c.l.b16 %v1698
          %v1722 = vunpack.c.l.b16 %v1699
          %v1723 = vunpack.c.l.b16 %v1700
          %v1724 = vunpack.c.l.b16 %v1701
          %v1725 = vunpack.c.l.b16 %v1702
          %v1726 = vunpack.c.l.b16 %v1703
          %v1727 = vpack.c.b16 %v1720, %v1719
          %v1728 = vpack.c.b16 %v1722, %v1721
          %v1729 = vpack.c.b16 %v1724, %v1723
          %v1730 = vpack.c.b16 %v1726, %v1725
          %vm1735 = vcmask 523264
          %v1737 = vsel %vm1735, %v1695, 0
          %1739 = vmatprep.subr.bf16.mxu0 0
          %1740 = vmatpush1.bf16.msra.mxu0 0
          %1741 = vmatprep.subr.bf16.mxu0 0
          %1742 = vmatpush1.bf16.msra.mxu0 0
          %1743 = vmatprep.subr.bf16.mxu0 0
          %1744 = vmatpush1.bf16.msra.mxu0 0
          %1745 = vmatprep.subr.bf16.mxu0 0
          %1746 = vmatpush1.bf16.msra.mxu0 0
          %1747 = vmatprep.subr.bf16.mxu0 0
          %1748 = vmatpush1.bf16.msra.mxu0 %v1730
          %1749 = vmatprep.subr.bf16.mxu0 0
          %1750 = vmatpush1.bf16.msra.mxu0 %v1729
          %1751 = vmatprep.subr.bf16.mxu0 0
          %1752 = vmatpush1.bf16.msra.mxu0 %v1728
          %1753 = vmatprep.subr.bf16.mxu0 0
          %1754 = vmatpush1.bf16.msra.mxu0 %v1727
          %1755 = vmatprep.subr.bf16.mxu0 0
          %1756 = vmatpush2.bf16.msra.mxu0 0
          %1757 = vmatprep.subr.bf16.mxu0 0
          %1758 = vmatpush2.bf16.msra.mxu0 0
          %1759 = vmatprep.subr.bf16.mxu0 0
          %1760 = vmatpush2.bf16.msra.mxu0 0
          %1761 = vmatprep.subr.bf16.mxu0 0
          %1762 = vmatpush2.bf16.msra.mxu0 0
          %1763 = vmatprep.subr.bf16.mxu0 0
          %1764 = vmatpush2.bf16.msra.mxu0 0
          %1765 = vmatprep.subr.bf16.mxu0 0
          %1766 = vmatpush2.bf16.msra.mxu0 0
          %1767 = vmatprep.subr.bf16.mxu0 0
          %1768 = vmatpush2.bf16.msra.mxu0 0
          %1769 = vmatprep.subr.bf16.mxu0 0
          %1770 = vmatpush2.bf16.msra.mxu0 0
          %1771 = vmatprep.mubr.bf16.mxu0 0
          %1772 = vmatmul.mubr.bf16.gmra.mxu0 %v1737
          %v1773 = vpop.f32.mrf.mxu0
          %v1774 = vadd.f32 %v1709, %v1773
          %v1775 = vpop.f32.mrf.mxu0
          %v1776 = vpop.f32.mrf.mxu0
          %v1777 = vpop.f32.mrf.mxu0
          %1778 = vdwg.mxu0
          %v1779 = vadd.f32 %v1626, %v1774
          %v1780 = vsel %vm897, %v1779, 0.0
          %1781 = vadd.xlane.f32.xlu0 %v1780
          %v1782 = vpop.xlane.xlu0 %1781
          %v1783 = vmul.f32 %v1782, %v1600
          %v1784 = vsub.f32 %v1779, %v1783
          %v1785 = vmul.f32 %v1784, %v1784
          %v1786 = vsel %vm897, %v1785, 0.0
          %1787 = vadd.xlane.f32.xlu0 %v1786
          %v1788 = vpop.xlane.xlu0 %1787
          %v1789 = vmul.f32 %v1788, %v1600
          %v1790 = vadd.f32 %v1789, 1e-12
          %v1791 = vrsqrt.pop %v1790
          %v1792 = vmul.f32 %v1784, %v1791
          %v1793 = vld [vmem:[%s849] sm:$0x1]
          %v1795 = vlaneseq
          %v1796 = vshrl.u32 %v1795, 7
          %v1797 = vsub.s32 0, %v1796
          %v1798 = vrot.slane %v1793, %v1797
          %v1800 = vmul.f32 %v1792, %v1798
          %v1801 = vld [vmem:[%s852] sm:$0x1]
          %v1803 = vlaneseq
          %v1804 = vshrl.u32 %v1803, 7
          %v1805 = vsub.s32 0, %v1804
          %v1806 = vrot.slane %v1801, %v1805
          %v1808 = vadd.f32 %v1800, %v1806
          %1809 = vst.msk [vmem:[%s871] sm:$0xff] %vm897, %v1808
        $region109: #{tpu_custom_call.1} parent=87 // loop_footer
          %s869 = sadd.s32 1, %s865
        $region110: #{tpu_custom_call.1} parent=87 // loop_footer_branch
          %864 = sbr.rel target = $region106
        $region111: #{tpu_custom_call.1} parent=87 // loop_exit
          _
        // Predicated region
        $region112: #{tpu_custom_call.1} parent=87 // pred_check
          %p1810 = pneg %p505
        $region113: #{tpu_custom_call.1} parent=87 // pred_check_branch
          %1812 = sbr.rel (%p1810) target = $region115
        $region114: #{tpu_custom_call.1} parent=87 // pred_region
          %s1813 = smul.u32 2, %s37
          %s1815 = ssub.s32 256, 256
          %1816 = vsyncadd [#allocation5], %s1815
          %s1817 = smul.addr %s1813, 128
          %s1818 = scalar_lea.hbm %s17, %s1817
          %s1819 = sshll.u32 [#allocation9], 4
          %s1820 = int_to_ptr.vmem [resolvable:$true] %s1819
          %1825 = dma.vmem_to_hbm [thread:$0]  %s1820, 256, %s1818, [#allocation5], 128, 128, 8
        $region115: #{tpu_custom_call.1} parent=87 // pred_fallthru
          _
        // Predicated region
        $region116: #{tpu_custom_call.1} parent=87 // pred_check
          %p1826 = pneg %p505
        $region117: #{tpu_custom_call.1} parent=87 // pred_check_branch
          %1828 = sbr.rel (%p1826) target = $region119
        $region118: #{tpu_custom_call.1} parent=87 // pred_region
          %1829 = dma.done [#allocation5], 256
        $region119: #{tpu_custom_call.1} parent=87 // pred_fallthru
          _
      $region88: #{tpu_custom_call.1} parent=5 // pred_fallthru
        _
      %p1830 = scmp.le.s32.totalorder 2, %s28
      // Predicated region
      $region120: #{tpu_custom_call.1} parent=5 // pred_check
        %p1831 = pneg %p1830
      $region121: #{tpu_custom_call.1} parent=5 // pred_check_branch
        %1833 = sbr.rel (%p1831) target = $region123
      $region122: #{tpu_custom_call.1} parent=5 // pred_region
        %s1834 = ssub.s32 %s28, 2
      $region123: #{tpu_custom_call.1} parent=5 // pred_fallthru
        _
    $region6: #{tpu_custom_call.1} parent=1 // loop_footer
      %s32 = sadd.s32 1, %s28
    $region7: #{tpu_custom_call.1} parent=1 // loop_footer_branch
      %27 = sbr.rel target = $region3
    $region8: #{tpu_custom_call.1} parent=1 // loop_exit
      _
    %1835 = vsyncpa [#allocation4], 1
    %s1836 = scalar_lea.sflag [#allocation4], 1
    %1837 = vsyncpa %s1836, 1
    %1838 = vsyncpa [#allocation7], 1
    %s1839 = scalar_lea.sflag [#allocation7], 1
    %1840 = vsyncpa %s1839, 1
    %1841 = vsyncpa [#allocation5], 1
    %s1842 = scalar_lea.sflag [#allocation5], 1
    %1843 = vsyncpa %s1842, 1

</llo_original>
